<compile_context>
chip_gen: v5e
topology: v5e:2x2
jax: 0.10.0
libtpu: 0.0.40
codegen_flags: <defaults>
</compile_context>

<pallas_src>
import math

import numpy as np

import jax
import jax.numpy as jnp
from jax import lax
from jax.experimental import pallas as pl
from jax.experimental.pallas import tpu as pltpu

MXU_DTYPE = jnp.bfloat16   # MXU operand dtype; accumulation / bias / ReLU in f32.


def _full_spec(shape):
    """BlockSpec for an array needed in full at every grid step."""
    nd = len(shape)
    return pl.BlockSpec(shape, lambda n, _nd=nd: (0,) * _nd)


def _shift_lanes(x, k):
    """out[:, p] = x[:, (p + k) % n] for a static 0 <= k < n (lane rotation)."""
    if k == 0:
        return x
    return jnp.concatenate([x[:, k:], x[:, :k]], axis=1)


class _Ctx:
    """Static context threaded through the in-kernel tree recursion."""

    def __init__(self, refs, masks, h, w):
        self.refs = refs
        self.masks = masks          # (9, H*W) bf16, 1.0 where the tap is in-bounds
        self.H, self.W, self.HW = h, w, h * w


class ConvBlock:
    """block_factory: 3x3 conv (same padding, stride 1) + ReLU."""

    def __init__(self, key, c_in, c_out, downsample=1):
        assert downsample == 1      # the aggregation tree only ever uses 1
        k1, k2 = jax.random.split(key)
        scale = 1.0 / math.sqrt(9 * c_in)
        w = jax.random.normal(k1, (3, 3, c_in, c_out), jnp.float32) * scale
        self.w_f32 = w                                           # HWIO, f32 reference
        # Kernel layout: one (c_out, c_in) matrix per tap, pre-cast to bf16.
        self.w = jnp.transpose(w.reshape(9, c_in, c_out), (0, 2, 1)).astype(MXU_DTYPE)
        b = jax.random.normal(k2, (c_out,), jnp.float32) * 0.01
        self.b_f32 = b
        self.b = b.reshape(c_out, 1)                             # (c_out, 1) f32
        self.c_in, self.c_out = c_in, c_out
        self._idx = None

    def collect(self, params):
        self._idx = len(params)
        params.extend([self.w, self.b])

    def apply(self, ctx, x):
        """x: (c_in, H*W) activation in VMEM/vregs. Returns (c_out, H*W) bf16."""
        w = ctx.refs[self._idx][...]            # (9, c_out, c_in) bf16
        b = ctx.refs[self._idx + 1][...]        # (c_out, 1)       f32
        x = x.astype(MXU_DTYPE)
        acc = None
        for t in range(9):
            dy, dx = divmod(t, 3)
            if t == 4:                          # centre tap: no shift, all valid
                xt = x
            else:
                s = (dy - 1) * ctx.W + (dx - 1)        # flat-pixel offset of the tap
                xt = _shift_lanes(x, s % ctx.HW) * ctx.masks[t:t + 1, :]
            part = jnp.dot(w[t], xt, preferred_element_type=jnp.float32)
            acc = part if acc is None else acc + part
        return jnp.maximum(acc + b, 0.0).astype(MXU_DTYPE)

    def ref(self, x):
        """Pure-JAX f32 reference on NCHW input."""
        y = lax.conv_general_dilated(
            x, self.w_f32, (1, 1), "SAME",
            dimension_numbers=("NCHW", "HWIO", "NCHW"))
        return jnp.maximum(y + self.b_f32.reshape(1, -1, 1, 1), 0.0)


class Aggregator:
    """aggregator_factory: 1x1 conv over the concatenated channels.

    The concat is never materialized: the (pre-transposed, pre-cast bf16)
    weight is sliced per source and the per-source matmuls are accumulated
    (mathematically identical; torch.cat channel order is preserved).
    """

    def __init__(self, key, c_in, c_out):
        k1, k2 = jax.random.split(key)
        scale = 1.0 / math.sqrt(c_in)
        w = jax.random.normal(k1, (c_in, c_out), jnp.float32) * scale
        self.w_f32 = w                                           # (c_in, c_out) f32
        self.w = w.T.astype(MXU_DTYPE)                           # (c_out, c_in) bf16
        b = jax.random.normal(k2, (c_out,), jnp.float32) * 0.01
        self.b_f32 = b
        self.b = b.reshape(c_out, 1)
        self.c_in, self.c_out = c_in, c_out
        self._idx = None

    def collect(self, params):
        self._idx = len(params)
        params.extend([self.w, self.b])

    def apply(self, ctx, pieces):               # pieces: [(c_i, H*W), ...]
        w = ctx.refs[self._idx][...]            # (c_out, c_in) bf16
        b = ctx.refs[self._idx + 1][...]        # (c_out, 1)    f32
        acc, off = None, 0
        for p in pieces:
            c = p.shape[0]
            part = jnp.dot(w[:, off:off + c], p.astype(MXU_DTYPE),
                           preferred_element_type=jnp.float32)
            acc = part if acc is None else acc + part
            off += c
        assert off == self.c_in
        return acc + b                          # (c_out, H*W) f32

    def ref(self, pieces):                      # pieces: [(N, c_i, H, W) f32, ...]
        x = jnp.concatenate(pieces, axis=1)
        y = jnp.einsum("io,nihw->nohw", self.w_f32, x)
        return y + self.b_f32.reshape(1, -1, 1, 1)


class AggregationTreeNode:
    def __init__(self, key, channels_in, channels_out, level, channels_agg=0,
                 downsample=1):
        if channels_agg == 0:
            channels_agg = 2 * channels_out
        self.level = level
        self.aggregator = None
        k_left, k_right, k_agg = jax.random.split(key, 3)
        if level <= 0:
            self.left = ConvBlock(k_left, channels_in, channels_out,
                                  downsample=downsample)
            self.right = None
        elif level == 1:
            self.aggregator = Aggregator(k_agg, channels_agg, channels_out)
            self.left = ConvBlock(k_left, channels_in, channels_out,
                                  downsample=downsample)
            self.right = ConvBlock(k_right, channels_out, channels_out,
                                   downsample=1)
        else:
            self.left = AggregationTreeNode(k_left, channels_in, channels_out,
                                            level - 1, downsample=downsample)
            self.right = AggregationTreeNode(
                k_right, channels_out, channels_out, level - 1,
                channels_agg=channels_agg + channels_out, downsample=1)

    def collect(self, params):
        self.left.collect(params)
        if self.right is not None:
            self.right.collect(params)
        if self.aggregator is not None:
            self.aggregator.collect(params)

    def apply(self, ctx, x, pass_through=None):
        """In-kernel mirror of AggregationTreeNode.forward (values in vregs)."""
        if self.level <= 0:
            return self.left.apply(ctx, x)
        if pass_through is None:
            pass_through = []
        y_1 = self.left.apply(ctx, x)
        if self.aggregator is not None:
            y_2 = self.right.apply(ctx, y_1)
            return self.aggregator.apply(ctx, pass_through + [y_1, y_2])
        return self.right.apply(ctx, y_1, pass_through + [y_1])

    def ref_forward(self, x, pass_through=None):
        """Pure-JAX f32 reference of AggregationTreeNode.forward (NCHW)."""
        if self.level <= 0:
            return self.left.ref(x)
        if pass_through is None:
            pass_through = []
        if self.aggregator is not None:          # level == 1
            y_1 = self.left.ref(x)
            y_2 = self.right.ref(y_1)
            return self.aggregator.ref(pass_through + [y_1, y_2])
        y_1 = self.left.ref_forward(x)
        return self.right.ref_forward(y_1, pass_through + [y_1])


class AggregationTreeRoot(AggregationTreeNode):
    def __init__(self, key, channels_in, channels_out, tree_height,
                 downsample=1):
        channels_agg = 2 * channels_out + channels_in
        super().__init__(key, channels_in, channels_out, tree_height,
                         channels_agg=channels_agg, downsample=1)
        self.channels_in = channels_in
        self.channels_out = channels_out
        self.downsample = downsample

    def __call__(self, x_nchw):
        N, c_in, H, W = x_nchw.shape
        assert c_in == self.channels_in
        c_out = self.channels_out
        ds = self.downsample

        # Root MaxPool2d (floor semantics) as a trivial XLA op in the wrapper:
        # shrinks the kernel's input DMA by ds**2 and keeps the kernel free of
        # spatial reshapes.  The reference skips the pool when level == 0.
        if self.level > 0 and ds > 1:
            Hc, Wc = H // ds, W // ds
            xp = x_nchw[:, :, :Hc * ds, :Wc * ds]
            xp = xp.reshape(N, c_in, Hc, ds, Wc, ds).max(axis=(3, 5))
        else:
            Hc, Wc = H, W
            xp = x_nchw
        HW = Hc * Wc

        # Channels-major, lane-dense input: NCHW flattened over (H, W) is a
        # contiguous (free) reshape and puts the big pixel axis in lanes.
        x_flat = xp.reshape(N, c_in, HW).astype(MXU_DTYPE)

        # Per-tap zero-padding masks (1 where the shifted pixel is in-bounds),
        # precomputed on host and shared by every 3x3 conv in the tree.
        pos = np.arange(HW)
        yy, xx = pos // Wc, pos % Wc
        masks_np = np.zeros((9, HW), np.float32)
        for t in range(9):
            dy, dx = divmod(t, 3)
            masks_np[t] = ((yy + dy - 1 >= 0) & (yy + dy - 1 < Hc) &
                           (xx + dx - 1 >= 0) & (xx + dx - 1 < Wc))
        masks = jnp.asarray(masks_np, dtype=MXU_DTYPE)

        params = []
        self.collect(params)
        n_params = len(params)
        root = self

        def kernel(x_ref, masks_ref, *args):
            param_refs = args[:n_params]
            o_ref = args[n_params]
            ctx = _Ctx(param_refs, masks_ref[...], Hc, Wc)
            x = x_ref[0]                                    # (c_in, H*W) bf16
            if root.level == 0:
                y = root.left.apply(ctx, x)
            elif root.aggregator is not None:               # tree_height == 1
                y_1 = root.left.apply(ctx, x)
                y_2 = root.right.apply(ctx, y_1)
                y = root.aggregator.apply(ctx, [y_1, y_2, x])
            else:                                           # tree_height >= 2
                y_1 = root.left.apply(ctx, x)
                y = root.right.apply(ctx, y_1, [y_1, x])
            o_ref[0] = y.astype(o_ref.dtype)                # lane-dense store

        out = pl.pallas_call(
            kernel,
            out_shape=jax.ShapeDtypeStruct((N, c_out, HW), jnp.float32),
            grid=(N,),
            in_specs=[pl.BlockSpec((1, c_in, HW), lambda n: (n, 0, 0)),
                      _full_spec(masks.shape)]
                     + [_full_spec(p.shape) for p in params],
            out_specs=pl.BlockSpec((1, c_out, HW), lambda n: (n, 0, 0)),
            compiler_params=pltpu.CompilerParams(
                dimension_semantics=("parallel",)),
        )(x_flat, masks, *params)

        # (N, c_out, Hc*Wc) -> NCHW is a contiguous split of the last dim
        # (free); no wrapper-side HBM transpose pass.
        return out.reshape(N, c_out, Hc, Wc)

    def ref_call(self, x):
        """Pure-JAX f32 reference of AggregationTreeRoot.forward (NCHW)."""
        if self.level == 0:
            return self.left.ref(x)
        if self.downsample > 1:
            N, C, H, W = x.shape
            ds = self.downsample
            Hc, Wc = H // ds, W // ds
            x = x[:, :, :Hc * ds, :Wc * ds]
            x = x.reshape(N, C, Hc, ds, Wc, ds).max(axis=(3, 5))
        if self.aggregator is not None:          # tree_height == 1
            y_1 = self.left.ref(x)
            y_2 = self.right.ref(y_1)
            return self.aggregator.ref([y_1, y_2, x])
        y_1 = self.left.ref_forward(x)
        return self.right.ref_forward(y_1, [y_1, x])


# ----------------------------------------------------------------------------
if __name__ == "__main__":
    key = jax.random.PRNGKey(0)
    pkey, xkey = jax.random.split(key)

    N, C_IN, H, W = 2, 4, 16, 16
    C_OUT, TREE_HEIGHT, DOWNSAMPLE = 8, 2, 2

    model = AggregationTreeRoot(pkey, C_IN, C_OUT, TREE_HEIGHT,
                                downsample=DOWNSAMPLE)

    x = jax.random.normal(xkey, (N, C_IN, H, W), jnp.float32)   # NCHW like torch
    y = jax.block_until_ready(model(x))

    assert y.shape == (N, C_OUT, H // DOWNSAMPLE, W // DOWNSAMPLE), y.shape
    assert bool(jnp.all(jnp.isfinite(y)))

    # Pure-JAX f32 reference (review correctness concern); the deviation is
    # bounded by the bf16 MXU operands / bf16 pass-through activations.
    y_ref = jax.block_until_ready(model.ref_call(x))
    max_err = float(jnp.max(jnp.abs(y - y_ref)))
    assert max_err < 0.15, max_err

    print("KERNEL_OK")
</pallas_src>

<mosaic_0001>
module attributes {stable_mosaic.version = 11 : i64} {
  func.func @kernel(%arg0: i32, %arg1: memref<1x4x64xbf16, #tpu.memory_space<vmem>>, %arg2: memref<9x64xbf16, #tpu.memory_space<vmem>>, %arg3: memref<9x8x4xbf16, #tpu.memory_space<vmem>>, %arg4: memref<8x1xf32, #tpu.memory_space<vmem>>, %arg5: memref<9x8x8xbf16, #tpu.memory_space<vmem>>, %arg6: memref<8x1xf32, #tpu.memory_space<vmem>>, %arg7: memref<8x16xbf16, #tpu.memory_space<vmem>>, %arg8: memref<8x1xf32, #tpu.memory_space<vmem>>, %arg9: memref<9x8x8xbf16, #tpu.memory_space<vmem>>, %arg10: memref<8x1xf32, #tpu.memory_space<vmem>>, %arg11: memref<9x8x8xbf16, #tpu.memory_space<vmem>>, %arg12: memref<8x1xf32, #tpu.memory_space<vmem>>, %arg13: memref<8x28xbf16, #tpu.memory_space<vmem>>, %arg14: memref<8x1xf32, #tpu.memory_space<vmem>>, %arg15: memref<1x8x64xf32, #tpu.memory_space<vmem>>) attributes {dimension_semantics = [#tpu.dimension_semantics<parallel>], iteration_bounds = array<i64: 2>, scalar_prefetch = 0 : i64, scratch_operands = 0 : i64, tpu.core_type = #tpu.core_type<tc>, window_params = [{transform_indices = @transform_0, window_bounds = array<i64: 1, 4, 64>}, {pipeline_mode = #tpu.pipeline_mode<synchronous>, transform_indices = @transform_1, window_bounds = array<i64: 9, 64>}, {pipeline_mode = #tpu.pipeline_mode<synchronous>, transform_indices = @transform_2, window_bounds = array<i64: 9, 8, 4>}, {pipeline_mode = #tpu.pipeline_mode<synchronous>, transform_indices = @transform_3, window_bounds = array<i64: 8, 1>}, {pipeline_mode = #tpu.pipeline_mode<synchronous>, transform_indices = @transform_4, window_bounds = array<i64: 9, 8, 8>}, {pipeline_mode = #tpu.pipeline_mode<synchronous>, transform_indices = @transform_5, window_bounds = array<i64: 8, 1>}, {pipeline_mode = #tpu.pipeline_mode<synchronous>, transform_indices = @transform_6, window_bounds = array<i64: 8, 16>}, {pipeline_mode = #tpu.pipeline_mode<synchronous>, transform_indices = @transform_7, window_bounds = array<i64: 8, 1>}, {pipeline_mode = #tpu.pipeline_mode<synchronous>, transform_indices = @transform_8, window_bounds = array<i64: 9, 8, 8>}, {pipeline_mode = #tpu.pipeline_mode<synchronous>, transform_indices = @transform_9, window_bounds = array<i64: 8, 1>}, {pipeline_mode = #tpu.pipeline_mode<synchronous>, transform_indices = @transform_10, window_bounds = array<i64: 9, 8, 8>}, {pipeline_mode = #tpu.pipeline_mode<synchronous>, transform_indices = @transform_11, window_bounds = array<i64: 8, 1>}, {pipeline_mode = #tpu.pipeline_mode<synchronous>, transform_indices = @transform_12, window_bounds = array<i64: 8, 28>}, {pipeline_mode = #tpu.pipeline_mode<synchronous>, transform_indices = @transform_13, window_bounds = array<i64: 8, 1>}, {transform_indices = @transform_14, window_bounds = array<i64: 1, 8, 64>}]} {
    %c0 = arith.constant 0 : index
    %c0_0 = arith.constant 0 : index
    %0 = vector.load %arg2[%c0, %c0_0] : memref<9x64xbf16, #tpu.memory_space<vmem>>, vector<9x64xbf16>
    %c0_1 = arith.constant 0 : index
    %c0_2 = arith.constant 0 : index
    %c0_3 = arith.constant 0 : index
    %1 = vector.load %arg1[%c0_1, %c0_2, %c0_3] : memref<1x4x64xbf16, #tpu.memory_space<vmem>>, vector<1x4x64xbf16>
    %2 = vector.shape_cast %1 : vector<1x4x64xbf16> to vector<4x64xbf16>
    %c0_4 = arith.constant 0 : index
    %c0_5 = arith.constant 0 : index
    %c0_6 = arith.constant 0 : index
    %3 = vector.load %arg3[%c0_4, %c0_5, %c0_6] : memref<9x8x4xbf16, #tpu.memory_space<vmem>>, vector<9x8x4xbf16>
    %c0_7 = arith.constant 0 : index
    %c0_8 = arith.constant 0 : index
    %4 = vector.load %arg4[%c0_7, %c0_8] : memref<8x1xf32, #tpu.memory_space<vmem>>, vector<8x1xf32>
    %5 = vector.extract_strided_slice %2 {offsets = [0, 55], sizes = [4, 9], strides = [1, 1]} : vector<4x64xbf16> to vector<4x9xbf16>
    %6 = vector.extract_strided_slice %2 {offsets = [0, 0], sizes = [4, 55], strides = [1, 1]} : vector<4x64xbf16> to vector<4x55xbf16>
    %7 = tpu.concatenate %5, %6 in 1 : vector<4x9xbf16>, vector<4x55xbf16> -> vector<4x64xbf16>
    %8 = vector.extract_strided_slice %0 {offsets = [0, 0], sizes = [1, 64], strides = [1, 1]} : vector<9x64xbf16> to vector<1x64xbf16>
    %9 = vector.broadcast %8 : vector<1x64xbf16> to vector<4x64xbf16>
    %10 = arith.mulf %7, %9 : vector<4x64xbf16>
    %11 = vector.extract_strided_slice %3 {offsets = [0, 0, 0], sizes = [1, 8, 4], strides = [1, 1, 1]} : vector<9x8x4xbf16> to vector<1x8x4xbf16>
    %12 = vector.shape_cast %11 : vector<1x8x4xbf16> to vector<8x4xbf16>
    %cst = arith.constant dense<0.000000e+00> : vector<8x64xf32>
    %13 = tpu.matmul %12, %10, %cst {dimension_numbers = #tpu.dot_dimension_numbers<[1], [0], [0], [1], [0, 0, 1, 1], [], []>} : vector<8x4xbf16>, vector<4x64xbf16>, vector<8x64xf32> -> vector<8x64xf32>
    %14 = vector.extract_strided_slice %2 {offsets = [0, 56], sizes = [4, 8], strides = [1, 1]} : vector<4x64xbf16> to vector<4x8xbf16>
    %15 = vector.extract_strided_slice %2 {offsets = [0, 0], sizes = [4, 56], strides = [1, 1]} : vector<4x64xbf16> to vector<4x56xbf16>
    %16 = tpu.concatenate %14, %15 in 1 : vector<4x8xbf16>, vector<4x56xbf16> -> vector<4x64xbf16>
    %17 = vector.extract_strided_slice %0 {offsets = [1, 0], sizes = [1, 64], strides = [1, 1]} : vector<9x64xbf16> to vector<1x64xbf16>
    %18 = vector.broadcast %17 : vector<1x64xbf16> to vector<4x64xbf16>
    %19 = arith.mulf %16, %18 : vector<4x64xbf16>
    %20 = vector.extract_strided_slice %3 {offsets = [1, 0, 0], sizes = [1, 8, 4], strides = [1, 1, 1]} : vector<9x8x4xbf16> to vector<1x8x4xbf16>
    %21 = vector.shape_cast %20 : vector<1x8x4xbf16> to vector<8x4xbf16>
    %cst_9 = arith.constant dense<0.000000e+00> : vector<8x64xf32>
    %22 = tpu.matmul %21, %19, %cst_9 {dimension_numbers = #tpu.dot_dimension_numbers<[1], [0], [0], [1], [0, 0, 1, 1], [], []>} : vector<8x4xbf16>, vector<4x64xbf16>, vector<8x64xf32> -> vector<8x64xf32>
    %23 = arith.addf %13, %22 : vector<8x64xf32>
    %24 = vector.extract_strided_slice %2 {offsets = [0, 57], sizes = [4, 7], strides = [1, 1]} : vector<4x64xbf16> to vector<4x7xbf16>
    %25 = vector.extract_strided_slice %2 {offsets = [0, 0], sizes = [4, 57], strides = [1, 1]} : vector<4x64xbf16> to vector<4x57xbf16>
    %26 = tpu.concatenate %24, %25 in 1 : vector<4x7xbf16>, vector<4x57xbf16> -> vector<4x64xbf16>
    %27 = vector.extract_strided_slice %0 {offsets = [2, 0], sizes = [1, 64], strides = [1, 1]} : vector<9x64xbf16> to vector<1x64xbf16>
    %28 = vector.broadcast %27 : vector<1x64xbf16> to vector<4x64xbf16>
    %29 = arith.mulf %26, %28 : vector<4x64xbf16>
    %30 = vector.extract_strided_slice %3 {offsets = [2, 0, 0], sizes = [1, 8, 4], strides = [1, 1, 1]} : vector<9x8x4xbf16> to vector<1x8x4xbf16>
    %31 = vector.shape_cast %30 : vector<1x8x4xbf16> to vector<8x4xbf16>
    %cst_10 = arith.constant dense<0.000000e+00> : vector<8x64xf32>
    %32 = tpu.matmul %31, %29, %cst_10 {dimension_numbers = #tpu.dot_dimension_numbers<[1], [0], [0], [1], [0, 0, 1, 1], [], []>} : vector<8x4xbf16>, vector<4x64xbf16>, vector<8x64xf32> -> vector<8x64xf32>
    %33 = arith.addf %23, %32 : vector<8x64xf32>
    %34 = vector.extract_strided_slice %2 {offsets = [0, 63], sizes = [4, 1], strides = [1, 1]} : vector<4x64xbf16> to vector<4x1xbf16>
    %35 = vector.extract_strided_slice %2 {offsets = [0, 0], sizes = [4, 63], strides = [1, 1]} : vector<4x64xbf16> to vector<4x63xbf16>
    %36 = tpu.concatenate %34, %35 in 1 : vector<4x1xbf16>, vector<4x63xbf16> -> vector<4x64xbf16>
    %37 = vector.extract_strided_slice %0 {offsets = [3, 0], sizes = [1, 64], strides = [1, 1]} : vector<9x64xbf16> to vector<1x64xbf16>
    %38 = vector.broadcast %37 : vector<1x64xbf16> to vector<4x64xbf16>
    %39 = arith.mulf %36, %38 : vector<4x64xbf16>
    %40 = vector.extract_strided_slice %3 {offsets = [3, 0, 0], sizes = [1, 8, 4], strides = [1, 1, 1]} : vector<9x8x4xbf16> to vector<1x8x4xbf16>
    %41 = vector.shape_cast %40 : vector<1x8x4xbf16> to vector<8x4xbf16>
    %cst_11 = arith.constant dense<0.000000e+00> : vector<8x64xf32>
    %42 = tpu.matmul %41, %39, %cst_11 {dimension_numbers = #tpu.dot_dimension_numbers<[1], [0], [0], [1], [0, 0, 1, 1], [], []>} : vector<8x4xbf16>, vector<4x64xbf16>, vector<8x64xf32> -> vector<8x64xf32>
    %43 = arith.addf %33, %42 : vector<8x64xf32>
    %44 = vector.extract_strided_slice %3 {offsets = [4, 0, 0], sizes = [1, 8, 4], strides = [1, 1, 1]} : vector<9x8x4xbf16> to vector<1x8x4xbf16>
    %45 = vector.shape_cast %44 : vector<1x8x4xbf16> to vector<8x4xbf16>
    %cst_12 = arith.constant dense<0.000000e+00> : vector<8x64xf32>
    %46 = tpu.matmul %45, %2, %cst_12 {dimension_numbers = #tpu.dot_dimension_numbers<[1], [0], [0], [1], [0, 0, 1, 1], [], []>} : vector<8x4xbf16>, vector<4x64xbf16>, vector<8x64xf32> -> vector<8x64xf32>
    %47 = arith.addf %43, %46 : vector<8x64xf32>
    %48 = vector.extract_strided_slice %2 {offsets = [0, 1], sizes = [4, 63], strides = [1, 1]} : vector<4x64xbf16> to vector<4x63xbf16>
    %49 = vector.extract_strided_slice %2 {offsets = [0, 0], sizes = [4, 1], strides = [1, 1]} : vector<4x64xbf16> to vector<4x1xbf16>
    %50 = tpu.concatenate %48, %49 in 1 : vector<4x63xbf16>, vector<4x1xbf16> -> vector<4x64xbf16>
    %51 = vector.extract_strided_slice %0 {offsets = [5, 0], sizes = [1, 64], strides = [1, 1]} : vector<9x64xbf16> to vector<1x64xbf16>
    %52 = vector.broadcast %51 : vector<1x64xbf16> to vector<4x64xbf16>
    %53 = arith.mulf %50, %52 : vector<4x64xbf16>
    %54 = vector.extract_strided_slice %3 {offsets = [5, 0, 0], sizes = [1, 8, 4], strides = [1, 1, 1]} : vector<9x8x4xbf16> to vector<1x8x4xbf16>
    %55 = vector.shape_cast %54 : vector<1x8x4xbf16> to vector<8x4xbf16>
    %cst_13 = arith.constant dense<0.000000e+00> : vector<8x64xf32>
    %56 = tpu.matmul %55, %53, %cst_13 {dimension_numbers = #tpu.dot_dimension_numbers<[1], [0], [0], [1], [0, 0, 1, 1], [], []>} : vector<8x4xbf16>, vector<4x64xbf16>, vector<8x64xf32> -> vector<8x64xf32>
    %57 = arith.addf %47, %56 : vector<8x64xf32>
    %58 = vector.extract_strided_slice %2 {offsets = [0, 7], sizes = [4, 57], strides = [1, 1]} : vector<4x64xbf16> to vector<4x57xbf16>
    %59 = vector.extract_strided_slice %2 {offsets = [0, 0], sizes = [4, 7], strides = [1, 1]} : vector<4x64xbf16> to vector<4x7xbf16>
    %60 = tpu.concatenate %58, %59 in 1 : vector<4x57xbf16>, vector<4x7xbf16> -> vector<4x64xbf16>
    %61 = vector.extract_strided_slice %0 {offsets = [6, 0], sizes = [1, 64], strides = [1, 1]} : vector<9x64xbf16> to vector<1x64xbf16>
    %62 = vector.broadcast %61 : vector<1x64xbf16> to vector<4x64xbf16>
    %63 = arith.mulf %60, %62 : vector<4x64xbf16>
    %64 = vector.extract_strided_slice %3 {offsets = [6, 0, 0], sizes = [1, 8, 4], strides = [1, 1, 1]} : vector<9x8x4xbf16> to vector<1x8x4xbf16>
    %65 = vector.shape_cast %64 : vector<1x8x4xbf16> to vector<8x4xbf16>
    %cst_14 = arith.constant dense<0.000000e+00> : vector<8x64xf32>
    %66 = tpu.matmul %65, %63, %cst_14 {dimension_numbers = #tpu.dot_dimension_numbers<[1], [0], [0], [1], [0, 0, 1, 1], [], []>} : vector<8x4xbf16>, vector<4x64xbf16>, vector<8x64xf32> -> vector<8x64xf32>
    %67 = arith.addf %57, %66 : vector<8x64xf32>
    %68 = vector.extract_strided_slice %2 {offsets = [0, 8], sizes = [4, 56], strides = [1, 1]} : vector<4x64xbf16> to vector<4x56xbf16>
    %69 = vector.extract_strided_slice %2 {offsets = [0, 0], sizes = [4, 8], strides = [1, 1]} : vector<4x64xbf16> to vector<4x8xbf16>
    %70 = tpu.concatenate %68, %69 in 1 : vector<4x56xbf16>, vector<4x8xbf16> -> vector<4x64xbf16>
    %71 = vector.extract_strided_slice %0 {offsets = [7, 0], sizes = [1, 64], strides = [1, 1]} : vector<9x64xbf16> to vector<1x64xbf16>
    %72 = vector.broadcast %71 : vector<1x64xbf16> to vector<4x64xbf16>
    %73 = arith.mulf %70, %72 : vector<4x64xbf16>
    %74 = vector.extract_strided_slice %3 {offsets = [7, 0, 0], sizes = [1, 8, 4], strides = [1, 1, 1]} : vector<9x8x4xbf16> to vector<1x8x4xbf16>
    %75 = vector.shape_cast %74 : vector<1x8x4xbf16> to vector<8x4xbf16>
    %cst_15 = arith.constant dense<0.000000e+00> : vector<8x64xf32>
    %76 = tpu.matmul %75, %73, %cst_15 {dimension_numbers = #tpu.dot_dimension_numbers<[1], [0], [0], [1], [0, 0, 1, 1], [], []>} : vector<8x4xbf16>, vector<4x64xbf16>, vector<8x64xf32> -> vector<8x64xf32>
    %77 = arith.addf %67, %76 : vector<8x64xf32>
    %78 = vector.extract_strided_slice %2 {offsets = [0, 9], sizes = [4, 55], strides = [1, 1]} : vector<4x64xbf16> to vector<4x55xbf16>
    %79 = vector.extract_strided_slice %2 {offsets = [0, 0], sizes = [4, 9], strides = [1, 1]} : vector<4x64xbf16> to vector<4x9xbf16>
    %80 = tpu.concatenate %78, %79 in 1 : vector<4x55xbf16>, vector<4x9xbf16> -> vector<4x64xbf16>
    %81 = vector.extract_strided_slice %0 {offsets = [8, 0], sizes = [1, 64], strides = [1, 1]} : vector<9x64xbf16> to vector<1x64xbf16>
    %82 = vector.broadcast %81 : vector<1x64xbf16> to vector<4x64xbf16>
    %83 = arith.mulf %80, %82 : vector<4x64xbf16>
    %84 = vector.extract_strided_slice %3 {offsets = [8, 0, 0], sizes = [1, 8, 4], strides = [1, 1, 1]} : vector<9x8x4xbf16> to vector<1x8x4xbf16>
    %85 = vector.shape_cast %84 : vector<1x8x4xbf16> to vector<8x4xbf16>
    %cst_16 = arith.constant dense<0.000000e+00> : vector<8x64xf32>
    %86 = tpu.matmul %85, %83, %cst_16 {dimension_numbers = #tpu.dot_dimension_numbers<[1], [0], [0], [1], [0, 0, 1, 1], [], []>} : vector<8x4xbf16>, vector<4x64xbf16>, vector<8x64xf32> -> vector<8x64xf32>
    %87 = arith.addf %77, %86 : vector<8x64xf32>
    %88 = vector.broadcast %4 : vector<8x1xf32> to vector<8x64xf32>
    %89 = arith.addf %87, %88 : vector<8x64xf32>
    %cst_17 = arith.constant 0.000000e+00 : f32
    %90 = vector.broadcast %cst_17 : f32 to vector<8x64xf32>
    %91 = arith.maximumf %89, %90 : vector<8x64xf32>
    %92 = arith.truncf %91 : vector<8x64xf32> to vector<8x64xbf16>
    %c0_18 = arith.constant 0 : index
    %c0_19 = arith.constant 0 : index
    %c0_20 = arith.constant 0 : index
    %93 = vector.load %arg5[%c0_18, %c0_19, %c0_20] : memref<9x8x8xbf16, #tpu.memory_space<vmem>>, vector<9x8x8xbf16>
    %c0_21 = arith.constant 0 : index
    %c0_22 = arith.constant 0 : index
    %94 = vector.load %arg6[%c0_21, %c0_22] : memref<8x1xf32, #tpu.memory_space<vmem>>, vector<8x1xf32>
    %95 = vector.extract_strided_slice %92 {offsets = [0, 55], sizes = [8, 9], strides = [1, 1]} : vector<8x64xbf16> to vector<8x9xbf16>
    %96 = vector.extract_strided_slice %92 {offsets = [0, 0], sizes = [8, 55], strides = [1, 1]} : vector<8x64xbf16> to vector<8x55xbf16>
    %97 = tpu.concatenate %95, %96 in 1 : vector<8x9xbf16>, vector<8x55xbf16> -> vector<8x64xbf16>
    %98 = vector.extract_strided_slice %0 {offsets = [0, 0], sizes = [1, 64], strides = [1, 1]} : vector<9x64xbf16> to vector<1x64xbf16>
    %99 = vector.broadcast %98 : vector<1x64xbf16> to vector<8x64xbf16>
    %100 = arith.mulf %97, %99 : vector<8x64xbf16>
    %101 = vector.extract_strided_slice %93 {offsets = [0, 0, 0], sizes = [1, 8, 8], strides = [1, 1, 1]} : vector<9x8x8xbf16> to vector<1x8x8xbf16>
    %102 = vector.shape_cast %101 : vector<1x8x8xbf16> to vector<8x8xbf16>
    %cst_23 = arith.constant dense<0.000000e+00> : vector<8x64xf32>
    %103 = tpu.matmul %102, %100, %cst_23 {dimension_numbers = #tpu.dot_dimension_numbers<[1], [0], [0], [1], [0, 0, 1, 1], [], []>} : vector<8x8xbf16>, vector<8x64xbf16>, vector<8x64xf32> -> vector<8x64xf32>
    %104 = vector.extract_strided_slice %92 {offsets = [0, 56], sizes = [8, 8], strides = [1, 1]} : vector<8x64xbf16> to vector<8x8xbf16>
    %105 = vector.extract_strided_slice %92 {offsets = [0, 0], sizes = [8, 56], strides = [1, 1]} : vector<8x64xbf16> to vector<8x56xbf16>
    %106 = tpu.concatenate %104, %105 in 1 : vector<8x8xbf16>, vector<8x56xbf16> -> vector<8x64xbf16>
    %107 = vector.extract_strided_slice %0 {offsets = [1, 0], sizes = [1, 64], strides = [1, 1]} : vector<9x64xbf16> to vector<1x64xbf16>
    %108 = vector.broadcast %107 : vector<1x64xbf16> to vector<8x64xbf16>
    %109 = arith.mulf %106, %108 : vector<8x64xbf16>
    %110 = vector.extract_strided_slice %93 {offsets = [1, 0, 0], sizes = [1, 8, 8], strides = [1, 1, 1]} : vector<9x8x8xbf16> to vector<1x8x8xbf16>
    %111 = vector.shape_cast %110 : vector<1x8x8xbf16> to vector<8x8xbf16>
    %cst_24 = arith.constant dense<0.000000e+00> : vector<8x64xf32>
    %112 = tpu.matmul %111, %109, %cst_24 {dimension_numbers = #tpu.dot_dimension_numbers<[1], [0], [0], [1], [0, 0, 1, 1], [], []>} : vector<8x8xbf16>, vector<8x64xbf16>, vector<8x64xf32> -> vector<8x64xf32>
    %113 = arith.addf %103, %112 : vector<8x64xf32>
    %114 = vector.extract_strided_slice %92 {offsets = [0, 57], sizes = [8, 7], strides = [1, 1]} : vector<8x64xbf16> to vector<8x7xbf16>
    %115 = vector.extract_strided_slice %92 {offsets = [0, 0], sizes = [8, 57], strides = [1, 1]} : vector<8x64xbf16> to vector<8x57xbf16>
    %116 = tpu.concatenate %114, %115 in 1 : vector<8x7xbf16>, vector<8x57xbf16> -> vector<8x64xbf16>
    %117 = vector.extract_strided_slice %0 {offsets = [2, 0], sizes = [1, 64], strides = [1, 1]} : vector<9x64xbf16> to vector<1x64xbf16>
    %118 = vector.broadcast %117 : vector<1x64xbf16> to vector<8x64xbf16>
    %119 = arith.mulf %116, %118 : vector<8x64xbf16>
    %120 = vector.extract_strided_slice %93 {offsets = [2, 0, 0], sizes = [1, 8, 8], strides = [1, 1, 1]} : vector<9x8x8xbf16> to vector<1x8x8xbf16>
    %121 = vector.shape_cast %120 : vector<1x8x8xbf16> to vector<8x8xbf16>
    %cst_25 = arith.constant dense<0.000000e+00> : vector<8x64xf32>
    %122 = tpu.matmul %121, %119, %cst_25 {dimension_numbers = #tpu.dot_dimension_numbers<[1], [0], [0], [1], [0, 0, 1, 1], [], []>} : vector<8x8xbf16>, vector<8x64xbf16>, vector<8x64xf32> -> vector<8x64xf32>
    %123 = arith.addf %113, %122 : vector<8x64xf32>
    %124 = vector.extract_strided_slice %92 {offsets = [0, 63], sizes = [8, 1], strides = [1, 1]} : vector<8x64xbf16> to vector<8x1xbf16>
    %125 = vector.extract_strided_slice %92 {offsets = [0, 0], sizes = [8, 63], strides = [1, 1]} : vector<8x64xbf16> to vector<8x63xbf16>
    %126 = tpu.concatenate %124, %125 in 1 : vector<8x1xbf16>, vector<8x63xbf16> -> vector<8x64xbf16>
    %127 = vector.extract_strided_slice %0 {offsets = [3, 0], sizes = [1, 64], strides = [1, 1]} : vector<9x64xbf16> to vector<1x64xbf16>
    %128 = vector.broadcast %127 : vector<1x64xbf16> to vector<8x64xbf16>
    %129 = arith.mulf %126, %128 : vector<8x64xbf16>
    %130 = vector.extract_strided_slice %93 {offsets = [3, 0, 0], sizes = [1, 8, 8], strides = [1, 1, 1]} : vector<9x8x8xbf16> to vector<1x8x8xbf16>
    %131 = vector.shape_cast %130 : vector<1x8x8xbf16> to vector<8x8xbf16>
    %cst_26 = arith.constant dense<0.000000e+00> : vector<8x64xf32>
    %132 = tpu.matmul %131, %129, %cst_26 {dimension_numbers = #tpu.dot_dimension_numbers<[1], [0], [0], [1], [0, 0, 1, 1], [], []>} : vector<8x8xbf16>, vector<8x64xbf16>, vector<8x64xf32> -> vector<8x64xf32>
    %133 = arith.addf %123, %132 : vector<8x64xf32>
    %134 = vector.extract_strided_slice %93 {offsets = [4, 0, 0], sizes = [1, 8, 8], strides = [1, 1, 1]} : vector<9x8x8xbf16> to vector<1x8x8xbf16>
    %135 = vector.shape_cast %134 : vector<1x8x8xbf16> to vector<8x8xbf16>
    %cst_27 = arith.constant dense<0.000000e+00> : vector<8x64xf32>
    %136 = tpu.matmul %135, %92, %cst_27 {dimension_numbers = #tpu.dot_dimension_numbers<[1], [0], [0], [1], [0, 0, 1, 1], [], []>} : vector<8x8xbf16>, vector<8x64xbf16>, vector<8x64xf32> -> vector<8x64xf32>
    %137 = arith.addf %133, %136 : vector<8x64xf32>
    %138 = vector.extract_strided_slice %92 {offsets = [0, 1], sizes = [8, 63], strides = [1, 1]} : vector<8x64xbf16> to vector<8x63xbf16>
    %139 = vector.extract_strided_slice %92 {offsets = [0, 0], sizes = [8, 1], strides = [1, 1]} : vector<8x64xbf16> to vector<8x1xbf16>
    %140 = tpu.concatenate %138, %139 in 1 : vector<8x63xbf16>, vector<8x1xbf16> -> vector<8x64xbf16>
    %141 = vector.extract_strided_slice %0 {offsets = [5, 0], sizes = [1, 64], strides = [1, 1]} : vector<9x64xbf16> to vector<1x64xbf16>
    %142 = vector.broadcast %141 : vector<1x64xbf16> to vector<8x64xbf16>
    %143 = arith.mulf %140, %142 : vector<8x64xbf16>
    %144 = vector.extract_strided_slice %93 {offsets = [5, 0, 0], sizes = [1, 8, 8], strides = [1, 1, 1]} : vector<9x8x8xbf16> to vector<1x8x8xbf16>
    %145 = vector.shape_cast %144 : vector<1x8x8xbf16> to vector<8x8xbf16>
    %cst_28 = arith.constant dense<0.000000e+00> : vector<8x64xf32>
    %146 = tpu.matmul %145, %143, %cst_28 {dimension_numbers = #tpu.dot_dimension_numbers<[1], [0], [0], [1], [0, 0, 1, 1], [], []>} : vector<8x8xbf16>, vector<8x64xbf16>, vector<8x64xf32> -> vector<8x64xf32>
    %147 = arith.addf %137, %146 : vector<8x64xf32>
    %148 = vector.extract_strided_slice %92 {offsets = [0, 7], sizes = [8, 57], strides = [1, 1]} : vector<8x64xbf16> to vector<8x57xbf16>
    %149 = vector.extract_strided_slice %92 {offsets = [0, 0], sizes = [8, 7], strides = [1, 1]} : vector<8x64xbf16> to vector<8x7xbf16>
    %150 = tpu.concatenate %148, %149 in 1 : vector<8x57xbf16>, vector<8x7xbf16> -> vector<8x64xbf16>
    %151 = vector.extract_strided_slice %0 {offsets = [6, 0], sizes = [1, 64], strides = [1, 1]} : vector<9x64xbf16> to vector<1x64xbf16>
    %152 = vector.broadcast %151 : vector<1x64xbf16> to vector<8x64xbf16>
    %153 = arith.mulf %150, %152 : vector<8x64xbf16>
    %154 = vector.extract_strided_slice %93 {offsets = [6, 0, 0], sizes = [1, 8, 8], strides = [1, 1, 1]} : vector<9x8x8xbf16> to vector<1x8x8xbf16>
    %155 = vector.shape_cast %154 : vector<1x8x8xbf16> to vector<8x8xbf16>
    %cst_29 = arith.constant dense<0.000000e+00> : vector<8x64xf32>
    %156 = tpu.matmul %155, %153, %cst_29 {dimension_numbers = #tpu.dot_dimension_numbers<[1], [0], [0], [1], [0, 0, 1, 1], [], []>} : vector<8x8xbf16>, vector<8x64xbf16>, vector<8x64xf32> -> vector<8x64xf32>
    %157 = arith.addf %147, %156 : vector<8x64xf32>
    %158 = vector.extract_strided_slice %92 {offsets = [0, 8], sizes = [8, 56], strides = [1, 1]} : vector<8x64xbf16> to vector<8x56xbf16>
    %159 = vector.extract_strided_slice %92 {offsets = [0, 0], sizes = [8, 8], strides = [1, 1]} : vector<8x64xbf16> to vector<8x8xbf16>
    %160 = tpu.concatenate %158, %159 in 1 : vector<8x56xbf16>, vector<8x8xbf16> -> vector<8x64xbf16>
    %161 = vector.extract_strided_slice %0 {offsets = [7, 0], sizes = [1, 64], strides = [1, 1]} : vector<9x64xbf16> to vector<1x64xbf16>
    %162 = vector.broadcast %161 : vector<1x64xbf16> to vector<8x64xbf16>
    %163 = arith.mulf %160, %162 : vector<8x64xbf16>
    %164 = vector.extract_strided_slice %93 {offsets = [7, 0, 0], sizes = [1, 8, 8], strides = [1, 1, 1]} : vector<9x8x8xbf16> to vector<1x8x8xbf16>
    %165 = vector.shape_cast %164 : vector<1x8x8xbf16> to vector<8x8xbf16>
    %cst_30 = arith.constant dense<0.000000e+00> : vector<8x64xf32>
    %166 = tpu.matmul %165, %163, %cst_30 {dimension_numbers = #tpu.dot_dimension_numbers<[1], [0], [0], [1], [0, 0, 1, 1], [], []>} : vector<8x8xbf16>, vector<8x64xbf16>, vector<8x64xf32> -> vector<8x64xf32>
    %167 = arith.addf %157, %166 : vector<8x64xf32>
    %168 = vector.extract_strided_slice %92 {offsets = [0, 9], sizes = [8, 55], strides = [1, 1]} : vector<8x64xbf16> to vector<8x55xbf16>
    %169 = vector.extract_strided_slice %92 {offsets = [0, 0], sizes = [8, 9], strides = [1, 1]} : vector<8x64xbf16> to vector<8x9xbf16>
    %170 = tpu.concatenate %168, %169 in 1 : vector<8x55xbf16>, vector<8x9xbf16> -> vector<8x64xbf16>
    %171 = vector.extract_strided_slice %0 {offsets = [8, 0], sizes = [1, 64], strides = [1, 1]} : vector<9x64xbf16> to vector<1x64xbf16>
    %172 = vector.broadcast %171 : vector<1x64xbf16> to vector<8x64xbf16>
    %173 = arith.mulf %170, %172 : vector<8x64xbf16>
    %174 = vector.extract_strided_slice %93 {offsets = [8, 0, 0], sizes = [1, 8, 8], strides = [1, 1, 1]} : vector<9x8x8xbf16> to vector<1x8x8xbf16>
    %175 = vector.shape_cast %174 : vector<1x8x8xbf16> to vector<8x8xbf16>
    %cst_31 = arith.constant dense<0.000000e+00> : vector<8x64xf32>
    %176 = tpu.matmul %175, %173, %cst_31 {dimension_numbers = #tpu.dot_dimension_numbers<[1], [0], [0], [1], [0, 0, 1, 1], [], []>} : vector<8x8xbf16>, vector<8x64xbf16>, vector<8x64xf32> -> vector<8x64xf32>
    %177 = arith.addf %167, %176 : vector<8x64xf32>
    %178 = vector.broadcast %94 : vector<8x1xf32> to vector<8x64xf32>
    %179 = arith.addf %177, %178 : vector<8x64xf32>
    %cst_32 = arith.constant 0.000000e+00 : f32
    %180 = vector.broadcast %cst_32 : f32 to vector<8x64xf32>
    %181 = arith.maximumf %179, %180 : vector<8x64xf32>
    %182 = arith.truncf %181 : vector<8x64xf32> to vector<8x64xbf16>
    %c0_33 = arith.constant 0 : index
    %c0_34 = arith.constant 0 : index
    %183 = vector.load %arg7[%c0_33, %c0_34] : memref<8x16xbf16, #tpu.memory_space<vmem>>, vector<8x16xbf16>
    %c0_35 = arith.constant 0 : index
    %c0_36 = arith.constant 0 : index
    %184 = vector.load %arg8[%c0_35, %c0_36] : memref<8x1xf32, #tpu.memory_space<vmem>>, vector<8x1xf32>
    %185 = vector.extract_strided_slice %183 {offsets = [0, 0], sizes = [8, 8], strides = [1, 1]} : vector<8x16xbf16> to vector<8x8xbf16>
    %cst_37 = arith.constant dense<0.000000e+00> : vector<8x64xf32>
    %186 = tpu.matmul %185, %92, %cst_37 {dimension_numbers = #tpu.dot_dimension_numbers<[1], [0], [0], [1], [0, 0, 1, 1], [], []>} : vector<8x8xbf16>, vector<8x64xbf16>, vector<8x64xf32> -> vector<8x64xf32>
    %187 = vector.extract_strided_slice %183 {offsets = [0, 8], sizes = [8, 8], strides = [1, 1]} : vector<8x16xbf16> to vector<8x8xbf16>
    %cst_38 = arith.constant dense<0.000000e+00> : vector<8x64xf32>
    %188 = tpu.matmul %187, %182, %cst_38 {dimension_numbers = #tpu.dot_dimension_numbers<[1], [0], [0], [1], [0, 0, 1, 1], [], []>} : vector<8x8xbf16>, vector<8x64xbf16>, vector<8x64xf32> -> vector<8x64xf32>
    %189 = arith.addf %186, %188 : vector<8x64xf32>
    %190 = vector.broadcast %184 : vector<8x1xf32> to vector<8x64xf32>
    %191 = arith.addf %189, %190 : vector<8x64xf32>
    %c0_39 = arith.constant 0 : index
    %c0_40 = arith.constant 0 : index
    %c0_41 = arith.constant 0 : index
    %192 = vector.load %arg9[%c0_39, %c0_40, %c0_41] : memref<9x8x8xbf16, #tpu.memory_space<vmem>>, vector<9x8x8xbf16>
    %c0_42 = arith.constant 0 : index
    %c0_43 = arith.constant 0 : index
    %193 = vector.load %arg10[%c0_42, %c0_43] : memref<8x1xf32, #tpu.memory_space<vmem>>, vector<8x1xf32>
    %194 = arith.truncf %191 : vector<8x64xf32> to vector<8x64xbf16>
    %195 = vector.extract_strided_slice %194 {offsets = [0, 55], sizes = [8, 9], strides = [1, 1]} : vector<8x64xbf16> to vector<8x9xbf16>
    %196 = vector.extract_strided_slice %194 {offsets = [0, 0], sizes = [8, 55], strides = [1, 1]} : vector<8x64xbf16> to vector<8x55xbf16>
    %197 = tpu.concatenate %195, %196 in 1 : vector<8x9xbf16>, vector<8x55xbf16> -> vector<8x64xbf16>
    %198 = vector.extract_strided_slice %0 {offsets = [0, 0], sizes = [1, 64], strides = [1, 1]} : vector<9x64xbf16> to vector<1x64xbf16>
    %199 = vector.broadcast %198 : vector<1x64xbf16> to vector<8x64xbf16>
    %200 = arith.mulf %197, %199 : vector<8x64xbf16>
    %201 = vector.extract_strided_slice %192 {offsets = [0, 0, 0], sizes = [1, 8, 8], strides = [1, 1, 1]} : vector<9x8x8xbf16> to vector<1x8x8xbf16>
    %202 = vector.shape_cast %201 : vector<1x8x8xbf16> to vector<8x8xbf16>
    %cst_44 = arith.constant dense<0.000000e+00> : vector<8x64xf32>
    %203 = tpu.matmul %202, %200, %cst_44 {dimension_numbers = #tpu.dot_dimension_numbers<[1], [0], [0], [1], [0, 0, 1, 1], [], []>} : vector<8x8xbf16>, vector<8x64xbf16>, vector<8x64xf32> -> vector<8x64xf32>
    %204 = vector.extract_strided_slice %194 {offsets = [0, 56], sizes = [8, 8], strides = [1, 1]} : vector<8x64xbf16> to vector<8x8xbf16>
    %205 = vector.extract_strided_slice %194 {offsets = [0, 0], sizes = [8, 56], strides = [1, 1]} : vector<8x64xbf16> to vector<8x56xbf16>
    %206 = tpu.concatenate %204, %205 in 1 : vector<8x8xbf16>, vector<8x56xbf16> -> vector<8x64xbf16>
    %207 = vector.extract_strided_slice %0 {offsets = [1, 0], sizes = [1, 64], strides = [1, 1]} : vector<9x64xbf16> to vector<1x64xbf16>
    %208 = vector.broadcast %207 : vector<1x64xbf16> to vector<8x64xbf16>
    %209 = arith.mulf %206, %208 : vector<8x64xbf16>
    %210 = vector.extract_strided_slice %192 {offsets = [1, 0, 0], sizes = [1, 8, 8], strides = [1, 1, 1]} : vector<9x8x8xbf16> to vector<1x8x8xbf16>
    %211 = vector.shape_cast %210 : vector<1x8x8xbf16> to vector<8x8xbf16>
    %cst_45 = arith.constant dense<0.000000e+00> : vector<8x64xf32>
    %212 = tpu.matmul %211, %209, %cst_45 {dimension_numbers = #tpu.dot_dimension_numbers<[1], [0], [0], [1], [0, 0, 1, 1], [], []>} : vector<8x8xbf16>, vector<8x64xbf16>, vector<8x64xf32> -> vector<8x64xf32>
    %213 = arith.addf %203, %212 : vector<8x64xf32>
    %214 = vector.extract_strided_slice %194 {offsets = [0, 57], sizes = [8, 7], strides = [1, 1]} : vector<8x64xbf16> to vector<8x7xbf16>
    %215 = vector.extract_strided_slice %194 {offsets = [0, 0], sizes = [8, 57], strides = [1, 1]} : vector<8x64xbf16> to vector<8x57xbf16>
    %216 = tpu.concatenate %214, %215 in 1 : vector<8x7xbf16>, vector<8x57xbf16> -> vector<8x64xbf16>
    %217 = vector.extract_strided_slice %0 {offsets = [2, 0], sizes = [1, 64], strides = [1, 1]} : vector<9x64xbf16> to vector<1x64xbf16>
    %218 = vector.broadcast %217 : vector<1x64xbf16> to vector<8x64xbf16>
    %219 = arith.mulf %216, %218 : vector<8x64xbf16>
    %220 = vector.extract_strided_slice %192 {offsets = [2, 0, 0], sizes = [1, 8, 8], strides = [1, 1, 1]} : vector<9x8x8xbf16> to vector<1x8x8xbf16>
    %221 = vector.shape_cast %220 : vector<1x8x8xbf16> to vector<8x8xbf16>
    %cst_46 = arith.constant dense<0.000000e+00> : vector<8x64xf32>
    %222 = tpu.matmul %221, %219, %cst_46 {dimension_numbers = #tpu.dot_dimension_numbers<[1], [0], [0], [1], [0, 0, 1, 1], [], []>} : vector<8x8xbf16>, vector<8x64xbf16>, vector<8x64xf32> -> vector<8x64xf32>
    %223 = arith.addf %213, %222 : vector<8x64xf32>
    %224 = vector.extract_strided_slice %194 {offsets = [0, 63], sizes = [8, 1], strides = [1, 1]} : vector<8x64xbf16> to vector<8x1xbf16>
    %225 = vector.extract_strided_slice %194 {offsets = [0, 0], sizes = [8, 63], strides = [1, 1]} : vector<8x64xbf16> to vector<8x63xbf16>
    %226 = tpu.concatenate %224, %225 in 1 : vector<8x1xbf16>, vector<8x63xbf16> -> vector<8x64xbf16>
    %227 = vector.extract_strided_slice %0 {offsets = [3, 0], sizes = [1, 64], strides = [1, 1]} : vector<9x64xbf16> to vector<1x64xbf16>
    %228 = vector.broadcast %227 : vector<1x64xbf16> to vector<8x64xbf16>
    %229 = arith.mulf %226, %228 : vector<8x64xbf16>
    %230 = vector.extract_strided_slice %192 {offsets = [3, 0, 0], sizes = [1, 8, 8], strides = [1, 1, 1]} : vector<9x8x8xbf16> to vector<1x8x8xbf16>
    %231 = vector.shape_cast %230 : vector<1x8x8xbf16> to vector<8x8xbf16>
    %cst_47 = arith.constant dense<0.000000e+00> : vector<8x64xf32>
    %232 = tpu.matmul %231, %229, %cst_47 {dimension_numbers = #tpu.dot_dimension_numbers<[1], [0], [0], [1], [0, 0, 1, 1], [], []>} : vector<8x8xbf16>, vector<8x64xbf16>, vector<8x64xf32> -> vector<8x64xf32>
    %233 = arith.addf %223, %232 : vector<8x64xf32>
    %234 = vector.extract_strided_slice %192 {offsets = [4, 0, 0], sizes = [1, 8, 8], strides = [1, 1, 1]} : vector<9x8x8xbf16> to vector<1x8x8xbf16>
    %235 = vector.shape_cast %234 : vector<1x8x8xbf16> to vector<8x8xbf16>
    %cst_48 = arith.constant dense<0.000000e+00> : vector<8x64xf32>
    %236 = tpu.matmul %235, %194, %cst_48 {dimension_numbers = #tpu.dot_dimension_numbers<[1], [0], [0], [1], [0, 0, 1, 1], [], []>} : vector<8x8xbf16>, vector<8x64xbf16>, vector<8x64xf32> -> vector<8x64xf32>
    %237 = arith.addf %233, %236 : vector<8x64xf32>
    %238 = vector.extract_strided_slice %194 {offsets = [0, 1], sizes = [8, 63], strides = [1, 1]} : vector<8x64xbf16> to vector<8x63xbf16>
    %239 = vector.extract_strided_slice %194 {offsets = [0, 0], sizes = [8, 1], strides = [1, 1]} : vector<8x64xbf16> to vector<8x1xbf16>
    %240 = tpu.concatenate %238, %239 in 1 : vector<8x63xbf16>, vector<8x1xbf16> -> vector<8x64xbf16>
    %241 = vector.extract_strided_slice %0 {offsets = [5, 0], sizes = [1, 64], strides = [1, 1]} : vector<9x64xbf16> to vector<1x64xbf16>
    %242 = vector.broadcast %241 : vector<1x64xbf16> to vector<8x64xbf16>
    %243 = arith.mulf %240, %242 : vector<8x64xbf16>
    %244 = vector.extract_strided_slice %192 {offsets = [5, 0, 0], sizes = [1, 8, 8], strides = [1, 1, 1]} : vector<9x8x8xbf16> to vector<1x8x8xbf16>
    %245 = vector.shape_cast %244 : vector<1x8x8xbf16> to vector<8x8xbf16>
    %cst_49 = arith.constant dense<0.000000e+00> : vector<8x64xf32>
    %246 = tpu.matmul %245, %243, %cst_49 {dimension_numbers = #tpu.dot_dimension_numbers<[1], [0], [0], [1], [0, 0, 1, 1], [], []>} : vector<8x8xbf16>, vector<8x64xbf16>, vector<8x64xf32> -> vector<8x64xf32>
    %247 = arith.addf %237, %246 : vector<8x64xf32>
    %248 = vector.extract_strided_slice %194 {offsets = [0, 7], sizes = [8, 57], strides = [1, 1]} : vector<8x64xbf16> to vector<8x57xbf16>
    %249 = vector.extract_strided_slice %194 {offsets = [0, 0], sizes = [8, 7], strides = [1, 1]} : vector<8x64xbf16> to vector<8x7xbf16>
    %250 = tpu.concatenate %248, %249 in 1 : vector<8x57xbf16>, vector<8x7xbf16> -> vector<8x64xbf16>
    %251 = vector.extract_strided_slice %0 {offsets = [6, 0], sizes = [1, 64], strides = [1, 1]} : vector<9x64xbf16> to vector<1x64xbf16>
    %252 = vector.broadcast %251 : vector<1x64xbf16> to vector<8x64xbf16>
    %253 = arith.mulf %250, %252 : vector<8x64xbf16>
    %254 = vector.extract_strided_slice %192 {offsets = [6, 0, 0], sizes = [1, 8, 8], strides = [1, 1, 1]} : vector<9x8x8xbf16> to vector<1x8x8xbf16>
    %255 = vector.shape_cast %254 : vector<1x8x8xbf16> to vector<8x8xbf16>
    %cst_50 = arith.constant dense<0.000000e+00> : vector<8x64xf32>
    %256 = tpu.matmul %255, %253, %cst_50 {dimension_numbers = #tpu.dot_dimension_numbers<[1], [0], [0], [1], [0, 0, 1, 1], [], []>} : vector<8x8xbf16>, vector<8x64xbf16>, vector<8x64xf32> -> vector<8x64xf32>
    %257 = arith.addf %247, %256 : vector<8x64xf32>
    %258 = vector.extract_strided_slice %194 {offsets = [0, 8], sizes = [8, 56], strides = [1, 1]} : vector<8x64xbf16> to vector<8x56xbf16>
    %259 = vector.extract_strided_slice %194 {offsets = [0, 0], sizes = [8, 8], strides = [1, 1]} : vector<8x64xbf16> to vector<8x8xbf16>
    %260 = tpu.concatenate %258, %259 in 1 : vector<8x56xbf16>, vector<8x8xbf16> -> vector<8x64xbf16>
    %261 = vector.extract_strided_slice %0 {offsets = [7, 0], sizes = [1, 64], strides = [1, 1]} : vector<9x64xbf16> to vector<1x64xbf16>
    %262 = vector.broadcast %261 : vector<1x64xbf16> to vector<8x64xbf16>
    %263 = arith.mulf %260, %262 : vector<8x64xbf16>
    %264 = vector.extract_strided_slice %192 {offsets = [7, 0, 0], sizes = [1, 8, 8], strides = [1, 1, 1]} : vector<9x8x8xbf16> to vector<1x8x8xbf16>
    %265 = vector.shape_cast %264 : vector<1x8x8xbf16> to vector<8x8xbf16>
    %cst_51 = arith.constant dense<0.000000e+00> : vector<8x64xf32>
    %266 = tpu.matmul %265, %263, %cst_51 {dimension_numbers = #tpu.dot_dimension_numbers<[1], [0], [0], [1], [0, 0, 1, 1], [], []>} : vector<8x8xbf16>, vector<8x64xbf16>, vector<8x64xf32> -> vector<8x64xf32>
    %267 = arith.addf %257, %266 : vector<8x64xf32>
    %268 = vector.extract_strided_slice %194 {offsets = [0, 9], sizes = [8, 55], strides = [1, 1]} : vector<8x64xbf16> to vector<8x55xbf16>
    %269 = vector.extract_strided_slice %194 {offsets = [0, 0], sizes = [8, 9], strides = [1, 1]} : vector<8x64xbf16> to vector<8x9xbf16>
    %270 = tpu.concatenate %268, %269 in 1 : vector<8x55xbf16>, vector<8x9xbf16> -> vector<8x64xbf16>
    %271 = vector.extract_strided_slice %0 {offsets = [8, 0], sizes = [1, 64], strides = [1, 1]} : vector<9x64xbf16> to vector<1x64xbf16>
    %272 = vector.broadcast %271 : vector<1x64xbf16> to vector<8x64xbf16>
    %273 = arith.mulf %270, %272 : vector<8x64xbf16>
    %274 = vector.extract_strided_slice %192 {offsets = [8, 0, 0], sizes = [1, 8, 8], strides = [1, 1, 1]} : vector<9x8x8xbf16> to vector<1x8x8xbf16>
    %275 = vector.shape_cast %274 : vector<1x8x8xbf16> to vector<8x8xbf16>
    %cst_52 = arith.constant dense<0.000000e+00> : vector<8x64xf32>
    %276 = tpu.matmul %275, %273, %cst_52 {dimension_numbers = #tpu.dot_dimension_numbers<[1], [0], [0], [1], [0, 0, 1, 1], [], []>} : vector<8x8xbf16>, vector<8x64xbf16>, vector<8x64xf32> -> vector<8x64xf32>
    %277 = arith.addf %267, %276 : vector<8x64xf32>
    %278 = vector.broadcast %193 : vector<8x1xf32> to vector<8x64xf32>
    %279 = arith.addf %277, %278 : vector<8x64xf32>
    %cst_53 = arith.constant 0.000000e+00 : f32
    %280 = vector.broadcast %cst_53 : f32 to vector<8x64xf32>
    %281 = arith.maximumf %279, %280 : vector<8x64xf32>
    %282 = arith.truncf %281 : vector<8x64xf32> to vector<8x64xbf16>
    %c0_54 = arith.constant 0 : index
    %c0_55 = arith.constant 0 : index
    %c0_56 = arith.constant 0 : index
    %283 = vector.load %arg11[%c0_54, %c0_55, %c0_56] : memref<9x8x8xbf16, #tpu.memory_space<vmem>>, vector<9x8x8xbf16>
    %c0_57 = arith.constant 0 : index
    %c0_58 = arith.constant 0 : index
    %284 = vector.load %arg12[%c0_57, %c0_58] : memref<8x1xf32, #tpu.memory_space<vmem>>, vector<8x1xf32>
    %285 = vector.extract_strided_slice %282 {offsets = [0, 55], sizes = [8, 9], strides = [1, 1]} : vector<8x64xbf16> to vector<8x9xbf16>
    %286 = vector.extract_strided_slice %282 {offsets = [0, 0], sizes = [8, 55], strides = [1, 1]} : vector<8x64xbf16> to vector<8x55xbf16>
    %287 = tpu.concatenate %285, %286 in 1 : vector<8x9xbf16>, vector<8x55xbf16> -> vector<8x64xbf16>
    %288 = vector.extract_strided_slice %0 {offsets = [0, 0], sizes = [1, 64], strides = [1, 1]} : vector<9x64xbf16> to vector<1x64xbf16>
    %289 = vector.broadcast %288 : vector<1x64xbf16> to vector<8x64xbf16>
    %290 = arith.mulf %287, %289 : vector<8x64xbf16>
    %291 = vector.extract_strided_slice %283 {offsets = [0, 0, 0], sizes = [1, 8, 8], strides = [1, 1, 1]} : vector<9x8x8xbf16> to vector<1x8x8xbf16>
    %292 = vector.shape_cast %291 : vector<1x8x8xbf16> to vector<8x8xbf16>
    %cst_59 = arith.constant dense<0.000000e+00> : vector<8x64xf32>
    %293 = tpu.matmul %292, %290, %cst_59 {dimension_numbers = #tpu.dot_dimension_numbers<[1], [0], [0], [1], [0, 0, 1, 1], [], []>} : vector<8x8xbf16>, vector<8x64xbf16>, vector<8x64xf32> -> vector<8x64xf32>
    %294 = vector.extract_strided_slice %282 {offsets = [0, 56], sizes = [8, 8], strides = [1, 1]} : vector<8x64xbf16> to vector<8x8xbf16>
    %295 = vector.extract_strided_slice %282 {offsets = [0, 0], sizes = [8, 56], strides = [1, 1]} : vector<8x64xbf16> to vector<8x56xbf16>
    %296 = tpu.concatenate %294, %295 in 1 : vector<8x8xbf16>, vector<8x56xbf16> -> vector<8x64xbf16>
    %297 = vector.extract_strided_slice %0 {offsets = [1, 0], sizes = [1, 64], strides = [1, 1]} : vector<9x64xbf16> to vector<1x64xbf16>
    %298 = vector.broadcast %297 : vector<1x64xbf16> to vector<8x64xbf16>
    %299 = arith.mulf %296, %298 : vector<8x64xbf16>
    %300 = vector.extract_strided_slice %283 {offsets = [1, 0, 0], sizes = [1, 8, 8], strides = [1, 1, 1]} : vector<9x8x8xbf16> to vector<1x8x8xbf16>
    %301 = vector.shape_cast %300 : vector<1x8x8xbf16> to vector<8x8xbf16>
    %cst_60 = arith.constant dense<0.000000e+00> : vector<8x64xf32>
    %302 = tpu.matmul %301, %299, %cst_60 {dimension_numbers = #tpu.dot_dimension_numbers<[1], [0], [0], [1], [0, 0, 1, 1], [], []>} : vector<8x8xbf16>, vector<8x64xbf16>, vector<8x64xf32> -> vector<8x64xf32>
    %303 = arith.addf %293, %302 : vector<8x64xf32>
    %304 = vector.extract_strided_slice %282 {offsets = [0, 57], sizes = [8, 7], strides = [1, 1]} : vector<8x64xbf16> to vector<8x7xbf16>
    %305 = vector.extract_strided_slice %282 {offsets = [0, 0], sizes = [8, 57], strides = [1, 1]} : vector<8x64xbf16> to vector<8x57xbf16>
    %306 = tpu.concatenate %304, %305 in 1 : vector<8x7xbf16>, vector<8x57xbf16> -> vector<8x64xbf16>
    %307 = vector.extract_strided_slice %0 {offsets = [2, 0], sizes = [1, 64], strides = [1, 1]} : vector<9x64xbf16> to vector<1x64xbf16>
    %308 = vector.broadcast %307 : vector<1x64xbf16> to vector<8x64xbf16>
    %309 = arith.mulf %306, %308 : vector<8x64xbf16>
    %310 = vector.extract_strided_slice %283 {offsets = [2, 0, 0], sizes = [1, 8, 8], strides = [1, 1, 1]} : vector<9x8x8xbf16> to vector<1x8x8xbf16>
    %311 = vector.shape_cast %310 : vector<1x8x8xbf16> to vector<8x8xbf16>
    %cst_61 = arith.constant dense<0.000000e+00> : vector<8x64xf32>
    %312 = tpu.matmul %311, %309, %cst_61 {dimension_numbers = #tpu.dot_dimension_numbers<[1], [0], [0], [1], [0, 0, 1, 1], [], []>} : vector<8x8xbf16>, vector<8x64xbf16>, vector<8x64xf32> -> vector<8x64xf32>
    %313 = arith.addf %303, %312 : vector<8x64xf32>
    %314 = vector.extract_strided_slice %282 {offsets = [0, 63], sizes = [8, 1], strides = [1, 1]} : vector<8x64xbf16> to vector<8x1xbf16>
    %315 = vector.extract_strided_slice %282 {offsets = [0, 0], sizes = [8, 63], strides = [1, 1]} : vector<8x64xbf16> to vector<8x63xbf16>
    %316 = tpu.concatenate %314, %315 in 1 : vector<8x1xbf16>, vector<8x63xbf16> -> vector<8x64xbf16>
    %317 = vector.extract_strided_slice %0 {offsets = [3, 0], sizes = [1, 64], strides = [1, 1]} : vector<9x64xbf16> to vector<1x64xbf16>
    %318 = vector.broadcast %317 : vector<1x64xbf16> to vector<8x64xbf16>
    %319 = arith.mulf %316, %318 : vector<8x64xbf16>
    %320 = vector.extract_strided_slice %283 {offsets = [3, 0, 0], sizes = [1, 8, 8], strides = [1, 1, 1]} : vector<9x8x8xbf16> to vector<1x8x8xbf16>
    %321 = vector.shape_cast %320 : vector<1x8x8xbf16> to vector<8x8xbf16>
    %cst_62 = arith.constant dense<0.000000e+00> : vector<8x64xf32>
    %322 = tpu.matmul %321, %319, %cst_62 {dimension_numbers = #tpu.dot_dimension_numbers<[1], [0], [0], [1], [0, 0, 1, 1], [], []>} : vector<8x8xbf16>, vector<8x64xbf16>, vector<8x64xf32> -> vector<8x64xf32>
    %323 = arith.addf %313, %322 : vector<8x64xf32>
    %324 = vector.extract_strided_slice %283 {offsets = [4, 0, 0], sizes = [1, 8, 8], strides = [1, 1, 1]} : vector<9x8x8xbf16> to vector<1x8x8xbf16>
    %325 = vector.shape_cast %324 : vector<1x8x8xbf16> to vector<8x8xbf16>
    %cst_63 = arith.constant dense<0.000000e+00> : vector<8x64xf32>
    %326 = tpu.matmul %325, %282, %cst_63 {dimension_numbers = #tpu.dot_dimension_numbers<[1], [0], [0], [1], [0, 0, 1, 1], [], []>} : vector<8x8xbf16>, vector<8x64xbf16>, vector<8x64xf32> -> vector<8x64xf32>
    %327 = arith.addf %323, %326 : vector<8x64xf32>
    %328 = vector.extract_strided_slice %282 {offsets = [0, 1], sizes = [8, 63], strides = [1, 1]} : vector<8x64xbf16> to vector<8x63xbf16>
    %329 = vector.extract_strided_slice %282 {offsets = [0, 0], sizes = [8, 1], strides = [1, 1]} : vector<8x64xbf16> to vector<8x1xbf16>
    %330 = tpu.concatenate %328, %329 in 1 : vector<8x63xbf16>, vector<8x1xbf16> -> vector<8x64xbf16>
    %331 = vector.extract_strided_slice %0 {offsets = [5, 0], sizes = [1, 64], strides = [1, 1]} : vector<9x64xbf16> to vector<1x64xbf16>
    %332 = vector.broadcast %331 : vector<1x64xbf16> to vector<8x64xbf16>
    %333 = arith.mulf %330, %332 : vector<8x64xbf16>
    %334 = vector.extract_strided_slice %283 {offsets = [5, 0, 0], sizes = [1, 8, 8], strides = [1, 1, 1]} : vector<9x8x8xbf16> to vector<1x8x8xbf16>
    %335 = vector.shape_cast %334 : vector<1x8x8xbf16> to vector<8x8xbf16>
    %cst_64 = arith.constant dense<0.000000e+00> : vector<8x64xf32>
    %336 = tpu.matmul %335, %333, %cst_64 {dimension_numbers = #tpu.dot_dimension_numbers<[1], [0], [0], [1], [0, 0, 1, 1], [], []>} : vector<8x8xbf16>, vector<8x64xbf16>, vector<8x64xf32> -> vector<8x64xf32>
    %337 = arith.addf %327, %336 : vector<8x64xf32>
    %338 = vector.extract_strided_slice %282 {offsets = [0, 7], sizes = [8, 57], strides = [1, 1]} : vector<8x64xbf16> to vector<8x57xbf16>
    %339 = vector.extract_strided_slice %282 {offsets = [0, 0], sizes = [8, 7], strides = [1, 1]} : vector<8x64xbf16> to vector<8x7xbf16>
    %340 = tpu.concatenate %338, %339 in 1 : vector<8x57xbf16>, vector<8x7xbf16> -> vector<8x64xbf16>
    %341 = vector.extract_strided_slice %0 {offsets = [6, 0], sizes = [1, 64], strides = [1, 1]} : vector<9x64xbf16> to vector<1x64xbf16>
    %342 = vector.broadcast %341 : vector<1x64xbf16> to vector<8x64xbf16>
    %343 = arith.mulf %340, %342 : vector<8x64xbf16>
    %344 = vector.extract_strided_slice %283 {offsets = [6, 0, 0], sizes = [1, 8, 8], strides = [1, 1, 1]} : vector<9x8x8xbf16> to vector<1x8x8xbf16>
    %345 = vector.shape_cast %344 : vector<1x8x8xbf16> to vector<8x8xbf16>
    %cst_65 = arith.constant dense<0.000000e+00> : vector<8x64xf32>
    %346 = tpu.matmul %345, %343, %cst_65 {dimension_numbers = #tpu.dot_dimension_numbers<[1], [0], [0], [1], [0, 0, 1, 1], [], []>} : vector<8x8xbf16>, vector<8x64xbf16>, vector<8x64xf32> -> vector<8x64xf32>
    %347 = arith.addf %337, %346 : vector<8x64xf32>
    %348 = vector.extract_strided_slice %282 {offsets = [0, 8], sizes = [8, 56], strides = [1, 1]} : vector<8x64xbf16> to vector<8x56xbf16>
    %349 = vector.extract_strided_slice %282 {offsets = [0, 0], sizes = [8, 8], strides = [1, 1]} : vector<8x64xbf16> to vector<8x8xbf16>
    %350 = tpu.concatenate %348, %349 in 1 : vector<8x56xbf16>, vector<8x8xbf16> -> vector<8x64xbf16>
    %351 = vector.extract_strided_slice %0 {offsets = [7, 0], sizes = [1, 64], strides = [1, 1]} : vector<9x64xbf16> to vector<1x64xbf16>
    %352 = vector.broadcast %351 : vector<1x64xbf16> to vector<8x64xbf16>
    %353 = arith.mulf %350, %352 : vector<8x64xbf16>
    %354 = vector.extract_strided_slice %283 {offsets = [7, 0, 0], sizes = [1, 8, 8], strides = [1, 1, 1]} : vector<9x8x8xbf16> to vector<1x8x8xbf16>
    %355 = vector.shape_cast %354 : vector<1x8x8xbf16> to vector<8x8xbf16>
    %cst_66 = arith.constant dense<0.000000e+00> : vector<8x64xf32>
    %356 = tpu.matmul %355, %353, %cst_66 {dimension_numbers = #tpu.dot_dimension_numbers<[1], [0], [0], [1], [0, 0, 1, 1], [], []>} : vector<8x8xbf16>, vector<8x64xbf16>, vector<8x64xf32> -> vector<8x64xf32>
    %357 = arith.addf %347, %356 : vector<8x64xf32>
    %358 = vector.extract_strided_slice %282 {offsets = [0, 9], sizes = [8, 55], strides = [1, 1]} : vector<8x64xbf16> to vector<8x55xbf16>
    %359 = vector.extract_strided_slice %282 {offsets = [0, 0], sizes = [8, 9], strides = [1, 1]} : vector<8x64xbf16> to vector<8x9xbf16>
    %360 = tpu.concatenate %358, %359 in 1 : vector<8x55xbf16>, vector<8x9xbf16> -> vector<8x64xbf16>
    %361 = vector.extract_strided_slice %0 {offsets = [8, 0], sizes = [1, 64], strides = [1, 1]} : vector<9x64xbf16> to vector<1x64xbf16>
    %362 = vector.broadcast %361 : vector<1x64xbf16> to vector<8x64xbf16>
    %363 = arith.mulf %360, %362 : vector<8x64xbf16>
    %364 = vector.extract_strided_slice %283 {offsets = [8, 0, 0], sizes = [1, 8, 8], strides = [1, 1, 1]} : vector<9x8x8xbf16> to vector<1x8x8xbf16>
    %365 = vector.shape_cast %364 : vector<1x8x8xbf16> to vector<8x8xbf16>
    %cst_67 = arith.constant dense<0.000000e+00> : vector<8x64xf32>
    %366 = tpu.matmul %365, %363, %cst_67 {dimension_numbers = #tpu.dot_dimension_numbers<[1], [0], [0], [1], [0, 0, 1, 1], [], []>} : vector<8x8xbf16>, vector<8x64xbf16>, vector<8x64xf32> -> vector<8x64xf32>
    %367 = arith.addf %357, %366 : vector<8x64xf32>
    %368 = vector.broadcast %284 : vector<8x1xf32> to vector<8x64xf32>
    %369 = arith.addf %367, %368 : vector<8x64xf32>
    %cst_68 = arith.constant 0.000000e+00 : f32
    %370 = vector.broadcast %cst_68 : f32 to vector<8x64xf32>
    %371 = arith.maximumf %369, %370 : vector<8x64xf32>
    %372 = arith.truncf %371 : vector<8x64xf32> to vector<8x64xbf16>
    %c0_69 = arith.constant 0 : index
    %c0_70 = arith.constant 0 : index
    %373 = vector.load %arg13[%c0_69, %c0_70] : memref<8x28xbf16, #tpu.memory_space<vmem>>, vector<8x28xbf16>
    %c0_71 = arith.constant 0 : index
    %c0_72 = arith.constant 0 : index
    %374 = vector.load %arg14[%c0_71, %c0_72] : memref<8x1xf32, #tpu.memory_space<vmem>>, vector<8x1xf32>
    %375 = vector.extract_strided_slice %373 {offsets = [0, 0], sizes = [8, 8], strides = [1, 1]} : vector<8x28xbf16> to vector<8x8xbf16>
    %376 = arith.truncf %191 : vector<8x64xf32> to vector<8x64xbf16>
    %cst_73 = arith.constant dense<0.000000e+00> : vector<8x64xf32>
    %377 = tpu.matmul %375, %376, %cst_73 {dimension_numbers = #tpu.dot_dimension_numbers<[1], [0], [0], [1], [0, 0, 1, 1], [], []>} : vector<8x8xbf16>, vector<8x64xbf16>, vector<8x64xf32> -> vector<8x64xf32>
    %378 = vector.extract_strided_slice %373 {offsets = [0, 8], sizes = [8, 4], strides = [1, 1]} : vector<8x28xbf16> to vector<8x4xbf16>
    %cst_74 = arith.constant dense<0.000000e+00> : vector<8x64xf32>
    %379 = tpu.matmul %378, %2, %cst_74 {dimension_numbers = #tpu.dot_dimension_numbers<[1], [0], [0], [1], [0, 0, 1, 1], [], []>} : vector<8x4xbf16>, vector<4x64xbf16>, vector<8x64xf32> -> vector<8x64xf32>
    %380 = arith.addf %377, %379 : vector<8x64xf32>
    %381 = vector.extract_strided_slice %373 {offsets = [0, 12], sizes = [8, 8], strides = [1, 1]} : vector<8x28xbf16> to vector<8x8xbf16>
    %cst_75 = arith.constant dense<0.000000e+00> : vector<8x64xf32>
    %382 = tpu.matmul %381, %282, %cst_75 {dimension_numbers = #tpu.dot_dimension_numbers<[1], [0], [0], [1], [0, 0, 1, 1], [], []>} : vector<8x8xbf16>, vector<8x64xbf16>, vector<8x64xf32> -> vector<8x64xf32>
    %383 = arith.addf %380, %382 : vector<8x64xf32>
    %384 = vector.extract_strided_slice %373 {offsets = [0, 20], sizes = [8, 8], strides = [1, 1]} : vector<8x28xbf16> to vector<8x8xbf16>
    %cst_76 = arith.constant dense<0.000000e+00> : vector<8x64xf32>
    %385 = tpu.matmul %384, %372, %cst_76 {dimension_numbers = #tpu.dot_dimension_numbers<[1], [0], [0], [1], [0, 0, 1, 1], [], []>} : vector<8x8xbf16>, vector<8x64xbf16>, vector<8x64xf32> -> vector<8x64xf32>
    %386 = arith.addf %383, %385 : vector<8x64xf32>
    %387 = vector.broadcast %374 : vector<8x1xf32> to vector<8x64xf32>
    %388 = arith.addf %386, %387 : vector<8x64xf32>
    %c0_77 = arith.constant 0 : index
    %c0_78 = arith.constant 0 : index
    %c0_79 = arith.constant 0 : index
    %389 = vector.load %arg15[%c0_77, %c0_78, %c0_79] : memref<1x8x64xf32, #tpu.memory_space<vmem>>, vector<1x8x64xf32>
    %390 = vector.shape_cast %389 : vector<1x8x64xf32> to vector<8x64xf32>
    %391 = vector.shape_cast %388 : vector<8x64xf32> to vector<1x8x64xf32>
    tpu.vector_store %arg15[%c0_77, %c0_78, %c0_79], %391 {strides = array<i32>} : memref<1x8x64xf32, #tpu.memory_space<vmem>>, vector<1x8x64xf32>,
    return
  }
  func.func @transform_0(%arg0: i32) -> (i32, i32, i32) {
    %c0_i32 = arith.constant 0 : i32
    %c0_i32_0 = arith.constant 0 : i32
    %c0_i32_1 = arith.constant 0 : i32
    return %arg0, %c0_i32, %c0_i32_0 : i32, i32, i32
  }
  func.func @transform_1(%arg0: i32) -> (i32, i32) {
    %c0_i32 = arith.constant 0 : i32
    %c0_i32_0 = arith.constant 0 : i32
    %c0_i32_1 = arith.constant 0 : i32
    return %c0_i32, %c0_i32_0 : i32, i32
  }
  func.func @transform_2(%arg0: i32) -> (i32, i32, i32) {
    %c0_i32 = arith.constant 0 : i32
    %c0_i32_0 = arith.constant 0 : i32
    %c0_i32_1 = arith.constant 0 : i32
    %c0_i32_2 = arith.constant 0 : i32
    return %c0_i32, %c0_i32_0, %c0_i32_1 : i32, i32, i32
  }
  func.func @transform_3(%arg0: i32) -> (i32, i32) {
    %c0_i32 = arith.constant 0 : i32
    %c0_i32_0 = arith.constant 0 : i32
    %c0_i32_1 = arith.constant 0 : i32
    return %c0_i32, %c0_i32_0 : i32, i32
  }
  func.func @transform_4(%arg0: i32) -> (i32, i32, i32) {
    %c0_i32 = arith.constant 0 : i32
    %c0_i32_0 = arith.constant 0 : i32
    %c0_i32_1 = arith.constant 0 : i32
    %c0_i32_2 = arith.constant 0 : i32
    return %c0_i32, %c0_i32_0, %c0_i32_1 : i32, i32, i32
  }
  func.func @transform_5(%arg0: i32) -> (i32, i32) {
    %c0_i32 = arith.constant 0 : i32
    %c0_i32_0 = arith.constant 0 : i32
    %c0_i32_1 = arith.constant 0 : i32
    return %c0_i32, %c0_i32_0 : i32, i32
  }
  func.func @transform_6(%arg0: i32) -> (i32, i32) {
    %c0_i32 = arith.constant 0 : i32
    %c0_i32_0 = arith.constant 0 : i32
    %c0_i32_1 = arith.constant 0 : i32
    return %c0_i32, %c0_i32_0 : i32, i32
  }
  func.func @transform_7(%arg0: i32) -> (i32, i32) {
    %c0_i32 = arith.constant 0 : i32
    %c0_i32_0 = arith.constant 0 : i32
    %c0_i32_1 = arith.constant 0 : i32
    return %c0_i32, %c0_i32_0 : i32, i32
  }
  func.func @transform_8(%arg0: i32) -> (i32, i32, i32) {
    %c0_i32 = arith.constant 0 : i32
    %c0_i32_0 = arith.constant 0 : i32
    %c0_i32_1 = arith.constant 0 : i32
    %c0_i32_2 = arith.constant 0 : i32
    return %c0_i32, %c0_i32_0, %c0_i32_1 : i32, i32, i32
  }
  func.func @transform_9(%arg0: i32) -> (i32, i32) {
    %c0_i32 = arith.constant 0 : i32
    %c0_i32_0 = arith.constant 0 : i32
    %c0_i32_1 = arith.constant 0 : i32
    return %c0_i32, %c0_i32_0 : i32, i32
  }
  func.func @transform_10(%arg0: i32) -> (i32, i32, i32) {
    %c0_i32 = arith.constant 0 : i32
    %c0_i32_0 = arith.constant 0 : i32
    %c0_i32_1 = arith.constant 0 : i32
    %c0_i32_2 = arith.constant 0 : i32
    return %c0_i32, %c0_i32_0, %c0_i32_1 : i32, i32, i32
  }
  func.func @transform_11(%arg0: i32) -> (i32, i32) {
    %c0_i32 = arith.constant 0 : i32
    %c0_i32_0 = arith.constant 0 : i32
    %c0_i32_1 = arith.constant 0 : i32
    return %c0_i32, %c0_i32_0 : i32, i32
  }
  func.func @transform_12(%arg0: i32) -> (i32, i32) {
    %c0_i32 = arith.constant 0 : i32
    %c0_i32_0 = arith.constant 0 : i32
    %c0_i32_1 = arith.constant 0 : i32
    return %c0_i32, %c0_i32_0 : i32, i32
  }
  func.func @transform_13(%arg0: i32) -> (i32, i32) {
    %c0_i32 = arith.constant 0 : i32
    %c0_i32_0 = arith.constant 0 : i32
    %c0_i32_1 = arith.constant 0 : i32
    return %c0_i32, %c0_i32_0 : i32, i32
  }
  func.func @transform_14(%arg0: i32) -> (i32, i32, i32) {
    %c0_i32 = arith.constant 0 : i32
    %c0_i32_0 = arith.constant 0 : i32
    %c0_i32_1 = arith.constant 0 : i32
    return %arg0, %c0_i32, %c0_i32_0 : i32, i32, i32
  }
}

</mosaic_0001>

<llo_original>
// kernel: tpu_custom_call.1
$region0: #{tpu_custom_call.1}
  #allocation0 [shape = 'u32[]', space=smem, size = 0x4, offset = 0x4, fixed_abs, tag = 'smem constant byte address 0x4 - core index']
  #allocation1 [shape = 'u32[72,128]{1,0:T(1,128)}', space=vmem, size = 0x9000, scoped, tag = 'internal scratch']
  %s0 = inlined_call_operand.vmem [shape: bf16[2,4,64], index: 0, kind: input, shape index: {}]
  %s1 = inlined_call_operand.vmem [shape: bf16[9,64], index: 1, kind: input, shape index: {}]
  %s2 = inlined_call_operand.vmem [shape: bf16[9,8,4], index: 2, kind: input, shape index: {}]
  %s3 = inlined_call_operand.vmem [shape: f32[8,1], index: 3, kind: input, shape index: {}]
  %s4 = inlined_call_operand.vmem [shape: bf16[9,8,8], index: 4, kind: input, shape index: {}]
  %s5 = inlined_call_operand.vmem [shape: f32[8,1], index: 5, kind: input, shape index: {}]
  %s6 = inlined_call_operand.vmem [shape: bf16[8,16], index: 6, kind: input, shape index: {}]
  %s7 = inlined_call_operand.vmem [shape: f32[8,1], index: 7, kind: input, shape index: {}]
  %s8 = inlined_call_operand.vmem [shape: bf16[9,8,8], index: 8, kind: input, shape index: {}]
  %s9 = inlined_call_operand.vmem [shape: f32[8,1], index: 9, kind: input, shape index: {}]
  %s10 = inlined_call_operand.vmem [shape: bf16[9,8,8], index: 10, kind: input, shape index: {}]
  %s11 = inlined_call_operand.vmem [shape: f32[8,1], index: 11, kind: input, shape index: {}]
  %s12 = inlined_call_operand.vmem [shape: bf16[8,28], index: 12, kind: input, shape index: {}]
  %s13 = inlined_call_operand.vmem [shape: f32[8,1], index: 13, kind: input, shape index: {}]
  %s14 = inlined_call_operand.hbm [shape: f32[2,8,64], index: 14, kind: output, shape index: {}]
  %s15 = sld [smem:[#allocation0]]
  $region89: #{tpu_custom_call.1} parent=0
    _
  %s17 = ssub.s32 1, %s15
  %s18 = scalar_select 0, %s17, %s15
  $region1: #{tpu_custom_call.1} parent=0
    #allocation2 [shape = 'u8[8192]{0}', space=vmem, size = 0x2000, scoped, tag = 'output window, operand 0']
    #allocation3 [shape = 's32[2]{0}', space=sflag, size = 0x8, scoped, tag = 'scoped memory for tpu_custom_call.1']
    %19 = vsyncpa [#allocation3], 0
    %s20 = scalar_lea.sflag [#allocation3], 1
    %21 = vsyncpa %s20, 0
    loop: start=0, step=1, limit=4
    $region2: #{tpu_custom_call.1} parent=1 // loop_pre_header
      _
    $region3: #{tpu_custom_call.1} parent=1 // loop_header
      %s23 = sphi 0, %s27
      %p24 = scmp.ge.s32.totalorder %s23, 4
      %s33 = sphi 0, %s35
      %s36 = sphi 0, %s33
      %s37 = sphi 0, %s36
      %s53 = sphi 0, %s37
      %s57 = sphi 0, %s57
      %s59 = sphi 0, %s57
      %s60 = sphi 0, %s59
      %s74 = sphi 0, %s60
      %s78 = sphi 0, %s78
      %s80 = sphi 0, %s78
      %s81 = sphi 0, %s80
      %s95 = sphi 0, %s81
      %s99 = sphi 0, %s99
      %s101 = sphi 0, %s99
      %s102 = sphi 0, %s101
      %s116 = sphi 0, %s102
      %s120 = sphi 0, %s120
      %s122 = sphi 0, %s120
      %s123 = sphi 0, %s122
      %s137 = sphi 0, %s123
      %s141 = sphi 0, %s141
      %s143 = sphi 0, %s141
      %s144 = sphi 0, %s143
      %s158 = sphi 0, %s144
      %s162 = sphi 0, %s162
      %s164 = sphi 0, %s162
      %s165 = sphi 0, %s164
      %s179 = sphi 0, %s165
      %s183 = sphi 0, %s183
      %s185 = sphi 0, %s183
      %s186 = sphi 0, %s185
      %s200 = sphi 0, %s186
      %s204 = sphi 0, %s204
      %s206 = sphi 0, %s204
      %s207 = sphi 0, %s206
      %s221 = sphi 0, %s207
      %s225 = sphi 0, %s225
      %s227 = sphi 0, %s225
      %s228 = sphi 0, %s227
      %s242 = sphi 0, %s228
      %s246 = sphi 0, %s246
      %s248 = sphi 0, %s246
      %s249 = sphi 0, %s248
      %s263 = sphi 0, %s249
      %s267 = sphi 0, %s267
      %s269 = sphi 0, %s267
      %s270 = sphi 0, %s269
      %s284 = sphi 0, %s270
      %s288 = sphi 0, %s288
      %s290 = sphi 0, %s288
      %s291 = sphi 0, %s290
      %s305 = sphi 0, %s291
      %s309 = sphi 0, %s309
      %s311 = sphi 0, %s309
      %s312 = sphi 0, %s311
      %s326 = sphi 0, %s312
      %s332 = sphi 0, %s334
      %s335 = sphi 0, %s332
      %s336 = sphi 0, %s335
      %s352 = sphi 0, %s336
    $region4: #{tpu_custom_call.1} parent=1 // loop_header_branch
      %26 = sbr.rel (%p24) target = $region8
    $region5: #{tpu_custom_call.1} parent=1 // loop_body
      %s28 = ssub.s32 %s23, 1
      %s29 = ssub.s32 %s23, 2
      %s30 = sadd.s32 %s23, 1
      %s31 = ssub.s32 %s23, %s30
      %p32 = scmp.eq.s32.totalorder %s31, 0
      %s34 = sadd.s32 %s33, 1
      %s35 = scalar_select %p32, %s33, %s34
      %p38 = pneg %p32
      %p39 = scmp.eq.s32.totalorder %s23, 1
      %p40 = por %p38, %p39
      %p41 = scmp.ne.s32.totalorder %s33, %s36
      %p42 = scmp.eq.s32.totalorder %s23, 0
      %p43 = por %p41, %p42
      %p44 = scmp.ne.s32.totalorder %s33, %s36
      %p45 = scmp.eq.s32.totalorder %s28, 1
      %p46 = por %p44, %p45
      %p47 = scmp.ne.s32.totalorder %s36, %s37
      %p48 = scmp.eq.s32.totalorder %s28, 0
      %p49 = por %p47, %p48
      %p50 = scmp.ne.s32.totalorder %s36, %s37
      %p51 = scmp.eq.s32.totalorder %s29, 1
      %p52 = por %p50, %p51
      %p54 = scmp.ne.s32.totalorder %s37, %s53
      %p55 = scmp.eq.s32.totalorder %s29, 0
      %p56 = por %p54, %p55
      %s58 = sadd.s32 %s57, 1
      %p61 = scmp.eq.s32.totalorder %s23, 1
      %p62 = scmp.ne.s32.totalorder %s57, %s59
      %p63 = scmp.eq.s32.totalorder %s23, 0
      %p64 = por %p62, %p63
      %p65 = scmp.ne.s32.totalorder %s57, %s59
      %p66 = scmp.eq.s32.totalorder %s28, 1
      %p67 = por %p65, %p66
      %p68 = scmp.ne.s32.totalorder %s59, %s60
      %p69 = scmp.eq.s32.totalorder %s28, 0
      %p70 = por %p68, %p69
      %p71 = scmp.ne.s32.totalorder %s59, %s60
      %p72 = scmp.eq.s32.totalorder %s29, 1
      %p73 = por %p71, %p72
      %p75 = scmp.ne.s32.totalorder %s60, %s74
      %p76 = scmp.eq.s32.totalorder %s29, 0
      %p77 = por %p75, %p76
      %s79 = sadd.s32 %s78, 1
      %p82 = scmp.eq.s32.totalorder %s23, 1
      %p83 = scmp.ne.s32.totalorder %s78, %s80
      %p84 = scmp.eq.s32.totalorder %s23, 0
      %p85 = por %p83, %p84
      %p86 = scmp.ne.s32.totalorder %s78, %s80
      %p87 = scmp.eq.s32.totalorder %s28, 1
      %p88 = por %p86, %p87
      %p89 = scmp.ne.s32.totalorder %s80, %s81
      %p90 = scmp.eq.s32.totalorder %s28, 0
      %p91 = por %p89, %p90
      %p92 = scmp.ne.s32.totalorder %s80, %s81
      %p93 = scmp.eq.s32.totalorder %s29, 1
      %p94 = por %p92, %p93
      %p96 = scmp.ne.s32.totalorder %s81, %s95
      %p97 = scmp.eq.s32.totalorder %s29, 0
      %p98 = por %p96, %p97
      %s100 = sadd.s32 %s99, 1
      %p103 = scmp.eq.s32.totalorder %s23, 1
      %p104 = scmp.ne.s32.totalorder %s99, %s101
      %p105 = scmp.eq.s32.totalorder %s23, 0
      %p106 = por %p104, %p105
      %p107 = scmp.ne.s32.totalorder %s99, %s101
      %p108 = scmp.eq.s32.totalorder %s28, 1
      %p109 = por %p107, %p108
      %p110 = scmp.ne.s32.totalorder %s101, %s102
      %p111 = scmp.eq.s32.totalorder %s28, 0
      %p112 = por %p110, %p111
      %p113 = scmp.ne.s32.totalorder %s101, %s102
      %p114 = scmp.eq.s32.totalorder %s29, 1
      %p115 = por %p113, %p114
      %p117 = scmp.ne.s32.totalorder %s102, %s116
      %p118 = scmp.eq.s32.totalorder %s29, 0
      %p119 = por %p117, %p118
      %s121 = sadd.s32 %s120, 1
      %p124 = scmp.eq.s32.totalorder %s23, 1
      %p125 = scmp.ne.s32.totalorder %s120, %s122
      %p126 = scmp.eq.s32.totalorder %s23, 0
      %p127 = por %p125, %p126
      %p128 = scmp.ne.s32.totalorder %s120, %s122
      %p129 = scmp.eq.s32.totalorder %s28, 1
      %p130 = por %p128, %p129
      %p131 = scmp.ne.s32.totalorder %s122, %s123
      %p132 = scmp.eq.s32.totalorder %s28, 0
      %p133 = por %p131, %p132
      %p134 = scmp.ne.s32.totalorder %s122, %s123
      %p135 = scmp.eq.s32.totalorder %s29, 1
      %p136 = por %p134, %p135
      %p138 = scmp.ne.s32.totalorder %s123, %s137
      %p139 = scmp.eq.s32.totalorder %s29, 0
      %p140 = por %p138, %p139
      %s142 = sadd.s32 %s141, 1
      %p145 = scmp.eq.s32.totalorder %s23, 1
      %p146 = scmp.ne.s32.totalorder %s141, %s143
      %p147 = scmp.eq.s32.totalorder %s23, 0
      %p148 = por %p146, %p147
      %p149 = scmp.ne.s32.totalorder %s141, %s143
      %p150 = scmp.eq.s32.totalorder %s28, 1
      %p151 = por %p149, %p150
      %p152 = scmp.ne.s32.totalorder %s143, %s144
      %p153 = scmp.eq.s32.totalorder %s28, 0
      %p154 = por %p152, %p153
      %p155 = scmp.ne.s32.totalorder %s143, %s144
      %p156 = scmp.eq.s32.totalorder %s29, 1
      %p157 = por %p155, %p156
      %p159 = scmp.ne.s32.totalorder %s144, %s158
      %p160 = scmp.eq.s32.totalorder %s29, 0
      %p161 = por %p159, %p160
      %s163 = sadd.s32 %s162, 1
      %p166 = scmp.eq.s32.totalorder %s23, 1
      %p167 = scmp.ne.s32.totalorder %s162, %s164
      %p168 = scmp.eq.s32.totalorder %s23, 0
      %p169 = por %p167, %p168
      %p170 = scmp.ne.s32.totalorder %s162, %s164
      %p171 = scmp.eq.s32.totalorder %s28, 1
      %p172 = por %p170, %p171
      %p173 = scmp.ne.s32.totalorder %s164, %s165
      %p174 = scmp.eq.s32.totalorder %s28, 0
      %p175 = por %p173, %p174
      %p176 = scmp.ne.s32.totalorder %s164, %s165
      %p177 = scmp.eq.s32.totalorder %s29, 1
      %p178 = por %p176, %p177
      %p180 = scmp.ne.s32.totalorder %s165, %s179
      %p181 = scmp.eq.s32.totalorder %s29, 0
      %p182 = por %p180, %p181
      %s184 = sadd.s32 %s183, 1
      %p187 = scmp.eq.s32.totalorder %s23, 1
      %p188 = scmp.ne.s32.totalorder %s183, %s185
      %p189 = scmp.eq.s32.totalorder %s23, 0
      %p190 = por %p188, %p189
      %p191 = scmp.ne.s32.totalorder %s183, %s185
      %p192 = scmp.eq.s32.totalorder %s28, 1
      %p193 = por %p191, %p192
      %p194 = scmp.ne.s32.totalorder %s185, %s186
      %p195 = scmp.eq.s32.totalorder %s28, 0
      %p196 = por %p194, %p195
      %p197 = scmp.ne.s32.totalorder %s185, %s186
      %p198 = scmp.eq.s32.totalorder %s29, 1
      %p199 = por %p197, %p198
      %p201 = scmp.ne.s32.totalorder %s186, %s200
      %p202 = scmp.eq.s32.totalorder %s29, 0
      %p203 = por %p201, %p202
      %s205 = sadd.s32 %s204, 1
      %p208 = scmp.eq.s32.totalorder %s23, 1
      %p209 = scmp.ne.s32.totalorder %s204, %s206
      %p210 = scmp.eq.s32.totalorder %s23, 0
      %p211 = por %p209, %p210
      %p212 = scmp.ne.s32.totalorder %s204, %s206
      %p213 = scmp.eq.s32.totalorder %s28, 1
      %p214 = por %p212, %p213
      %p215 = scmp.ne.s32.totalorder %s206, %s207
      %p216 = scmp.eq.s32.totalorder %s28, 0
      %p217 = por %p215, %p216
      %p218 = scmp.ne.s32.totalorder %s206, %s207
      %p219 = scmp.eq.s32.totalorder %s29, 1
      %p220 = por %p218, %p219
      %p222 = scmp.ne.s32.totalorder %s207, %s221
      %p223 = scmp.eq.s32.totalorder %s29, 0
      %p224 = por %p222, %p223
      %s226 = sadd.s32 %s225, 1
      %p229 = scmp.eq.s32.totalorder %s23, 1
      %p230 = scmp.ne.s32.totalorder %s225, %s227
      %p231 = scmp.eq.s32.totalorder %s23, 0
      %p232 = por %p230, %p231
      %p233 = scmp.ne.s32.totalorder %s225, %s227
      %p234 = scmp.eq.s32.totalorder %s28, 1
      %p235 = por %p233, %p234
      %p236 = scmp.ne.s32.totalorder %s227, %s228
      %p237 = scmp.eq.s32.totalorder %s28, 0
      %p238 = por %p236, %p237
      %p239 = scmp.ne.s32.totalorder %s227, %s228
      %p240 = scmp.eq.s32.totalorder %s29, 1
      %p241 = por %p239, %p240
      %p243 = scmp.ne.s32.totalorder %s228, %s242
      %p244 = scmp.eq.s32.totalorder %s29, 0
      %p245 = por %p243, %p244
      %s247 = sadd.s32 %s246, 1
      %p250 = scmp.eq.s32.totalorder %s23, 1
      %p251 = scmp.ne.s32.totalorder %s246, %s248
      %p252 = scmp.eq.s32.totalorder %s23, 0
      %p253 = por %p251, %p252
      %p254 = scmp.ne.s32.totalorder %s246, %s248
      %p255 = scmp.eq.s32.totalorder %s28, 1
      %p256 = por %p254, %p255
      %p257 = scmp.ne.s32.totalorder %s248, %s249
      %p258 = scmp.eq.s32.totalorder %s28, 0
      %p259 = por %p257, %p258
      %p260 = scmp.ne.s32.totalorder %s248, %s249
      %p261 = scmp.eq.s32.totalorder %s29, 1
      %p262 = por %p260, %p261
      %p264 = scmp.ne.s32.totalorder %s249, %s263
      %p265 = scmp.eq.s32.totalorder %s29, 0
      %p266 = por %p264, %p265
      %s268 = sadd.s32 %s267, 1
      %p271 = scmp.eq.s32.totalorder %s23, 1
      %p272 = scmp.ne.s32.totalorder %s267, %s269
      %p273 = scmp.eq.s32.totalorder %s23, 0
      %p274 = por %p272, %p273
      %p275 = scmp.ne.s32.totalorder %s267, %s269
      %p276 = scmp.eq.s32.totalorder %s28, 1
      %p277 = por %p275, %p276
      %p278 = scmp.ne.s32.totalorder %s269, %s270
      %p279 = scmp.eq.s32.totalorder %s28, 0
      %p280 = por %p278, %p279
      %p281 = scmp.ne.s32.totalorder %s269, %s270
      %p282 = scmp.eq.s32.totalorder %s29, 1
      %p283 = por %p281, %p282
      %p285 = scmp.ne.s32.totalorder %s270, %s284
      %p286 = scmp.eq.s32.totalorder %s29, 0
      %p287 = por %p285, %p286
      %s289 = sadd.s32 %s288, 1
      %p292 = scmp.eq.s32.totalorder %s23, 1
      %p293 = scmp.ne.s32.totalorder %s288, %s290
      %p294 = scmp.eq.s32.totalorder %s23, 0
      %p295 = por %p293, %p294
      %p296 = scmp.ne.s32.totalorder %s288, %s290
      %p297 = scmp.eq.s32.totalorder %s28, 1
      %p298 = por %p296, %p297
      %p299 = scmp.ne.s32.totalorder %s290, %s291
      %p300 = scmp.eq.s32.totalorder %s28, 0
      %p301 = por %p299, %p300
      %p302 = scmp.ne.s32.totalorder %s290, %s291
      %p303 = scmp.eq.s32.totalorder %s29, 1
      %p304 = por %p302, %p303
      %p306 = scmp.ne.s32.totalorder %s291, %s305
      %p307 = scmp.eq.s32.totalorder %s29, 0
      %p308 = por %p306, %p307
      %s310 = sadd.s32 %s309, 1
      %p313 = scmp.eq.s32.totalorder %s23, 1
      %p314 = scmp.ne.s32.totalorder %s309, %s311
      %p315 = scmp.eq.s32.totalorder %s23, 0
      %p316 = por %p314, %p315
      %p317 = scmp.ne.s32.totalorder %s309, %s311
      %p318 = scmp.eq.s32.totalorder %s28, 1
      %p319 = por %p317, %p318
      %p320 = scmp.ne.s32.totalorder %s311, %s312
      %p321 = scmp.eq.s32.totalorder %s28, 0
      %p322 = por %p320, %p321
      %p323 = scmp.ne.s32.totalorder %s311, %s312
      %p324 = scmp.eq.s32.totalorder %s29, 1
      %p325 = por %p323, %p324
      %p327 = scmp.ne.s32.totalorder %s312, %s326
      %p328 = scmp.eq.s32.totalorder %s29, 0
      %p329 = por %p327, %p328
      %s330 = ssub.s32 %s23, %s30
      %p331 = scmp.eq.s32.totalorder %s330, 0
      %s333 = sadd.s32 %s332, 1
      %s334 = scalar_select %p331, %s332, %s333
      %p337 = pneg %p331
      %p338 = scmp.eq.s32.totalorder %s23, 1
      %p339 = por %p337, %p338
      %p340 = scmp.ne.s32.totalorder %s332, %s335
      %p341 = scmp.eq.s32.totalorder %s23, 0
      %p342 = por %p340, %p341
      %p343 = scmp.ne.s32.totalorder %s332, %s335
      %p344 = scmp.eq.s32.totalorder %s28, 1
      %p345 = por %p343, %p344
      %p346 = scmp.ne.s32.totalorder %s335, %s336
      %p347 = scmp.eq.s32.totalorder %s28, 0
      %p348 = por %p346, %p347
      %p349 = scmp.ne.s32.totalorder %s335, %s336
      %p350 = scmp.eq.s32.totalorder %s29, 1
      %p351 = por %p349, %p350
      %p353 = scmp.ne.s32.totalorder %s336, %s352
      %p354 = scmp.eq.s32.totalorder %s29, 0
      %p355 = por %p353, %p354
      %p356 = scmp.le.s32.totalorder 1, %s23
      %p357 = scmp.lt.s32.totalorder %s23, 3
      %p358 = pnand %p356, %p357
      %p359 = pneg %p358
      // Predicated region
      $region9: #{tpu_custom_call.1} parent=5 // pred_check
        _
      $region10: #{tpu_custom_call.1} parent=5 // pred_check_branch
        %361 = sbr.rel (%p358) target = $region12
      $region11: #{tpu_custom_call.1} parent=5 // pred_region
        %s362 = ssub.s32 %s23, 1
        // Predicated region
        $region13: #{tpu_custom_call.1} parent=11 // pred_check
          %p363 = pneg %p70
        $region14: #{tpu_custom_call.1} parent=11 // pred_check_branch
          %365 = sbr.rel (%p363) target = $region16
        $region15: #{tpu_custom_call.1} parent=11 // pred_region
          _
        $region16: #{tpu_custom_call.1} parent=11 // pred_fallthru
          _
        // Predicated region
        $region17: #{tpu_custom_call.1} parent=11 // pred_check
          %p366 = pneg %p91
        $region18: #{tpu_custom_call.1} parent=11 // pred_check_branch
          %368 = sbr.rel (%p366) target = $region20
        $region19: #{tpu_custom_call.1} parent=11 // pred_region
          _
        $region20: #{tpu_custom_call.1} parent=11 // pred_fallthru
          _
        // Predicated region
        $region21: #{tpu_custom_call.1} parent=11 // pred_check
          %p369 = pneg %p112
        $region22: #{tpu_custom_call.1} parent=11 // pred_check_branch
          %371 = sbr.rel (%p369) target = $region24
        $region23: #{tpu_custom_call.1} parent=11 // pred_region
          _
        $region24: #{tpu_custom_call.1} parent=11 // pred_fallthru
          _
        // Predicated region
        $region25: #{tpu_custom_call.1} parent=11 // pred_check
          %p372 = pneg %p133
        $region26: #{tpu_custom_call.1} parent=11 // pred_check_branch
          %374 = sbr.rel (%p372) target = $region28
        $region27: #{tpu_custom_call.1} parent=11 // pred_region
          _
        $region28: #{tpu_custom_call.1} parent=11 // pred_fallthru
          _
        // Predicated region
        $region29: #{tpu_custom_call.1} parent=11 // pred_check
          %p375 = pneg %p154
        $region30: #{tpu_custom_call.1} parent=11 // pred_check_branch
          %377 = sbr.rel (%p375) target = $region32
        $region31: #{tpu_custom_call.1} parent=11 // pred_region
          _
        $region32: #{tpu_custom_call.1} parent=11 // pred_fallthru
          _
        // Predicated region
        $region33: #{tpu_custom_call.1} parent=11 // pred_check
          %p378 = pneg %p175
        $region34: #{tpu_custom_call.1} parent=11 // pred_check_branch
          %380 = sbr.rel (%p378) target = $region36
        $region35: #{tpu_custom_call.1} parent=11 // pred_region
          _
        $region36: #{tpu_custom_call.1} parent=11 // pred_fallthru
          _
        // Predicated region
        $region37: #{tpu_custom_call.1} parent=11 // pred_check
          %p381 = pneg %p196
        $region38: #{tpu_custom_call.1} parent=11 // pred_check_branch
          %383 = sbr.rel (%p381) target = $region40
        $region39: #{tpu_custom_call.1} parent=11 // pred_region
          _
        $region40: #{tpu_custom_call.1} parent=11 // pred_fallthru
          _
        // Predicated region
        $region41: #{tpu_custom_call.1} parent=11 // pred_check
          %p384 = pneg %p217
        $region42: #{tpu_custom_call.1} parent=11 // pred_check_branch
          %386 = sbr.rel (%p384) target = $region44
        $region43: #{tpu_custom_call.1} parent=11 // pred_region
          _
        $region44: #{tpu_custom_call.1} parent=11 // pred_fallthru
          _
        // Predicated region
        $region45: #{tpu_custom_call.1} parent=11 // pred_check
          %p387 = pneg %p238
        $region46: #{tpu_custom_call.1} parent=11 // pred_check_branch
          %389 = sbr.rel (%p387) target = $region48
        $region47: #{tpu_custom_call.1} parent=11 // pred_region
          _
        $region48: #{tpu_custom_call.1} parent=11 // pred_fallthru
          _
        // Predicated region
        $region49: #{tpu_custom_call.1} parent=11 // pred_check
          %p390 = pneg %p259
        $region50: #{tpu_custom_call.1} parent=11 // pred_check_branch
          %392 = sbr.rel (%p390) target = $region52
        $region51: #{tpu_custom_call.1} parent=11 // pred_region
          _
        $region52: #{tpu_custom_call.1} parent=11 // pred_fallthru
          _
        // Predicated region
        $region53: #{tpu_custom_call.1} parent=11 // pred_check
          %p393 = pneg %p280
        $region54: #{tpu_custom_call.1} parent=11 // pred_check_branch
          %395 = sbr.rel (%p393) target = $region56
        $region55: #{tpu_custom_call.1} parent=11 // pred_region
          _
        $region56: #{tpu_custom_call.1} parent=11 // pred_fallthru
          _
        // Predicated region
        $region57: #{tpu_custom_call.1} parent=11 // pred_check
          %p396 = pneg %p301
        $region58: #{tpu_custom_call.1} parent=11 // pred_check_branch
          %398 = sbr.rel (%p396) target = $region60
        $region59: #{tpu_custom_call.1} parent=11 // pred_region
          _
        $region60: #{tpu_custom_call.1} parent=11 // pred_fallthru
          _
        // Predicated region
        $region61: #{tpu_custom_call.1} parent=11 // pred_check
          %p399 = pneg %p322
        $region62: #{tpu_custom_call.1} parent=11 // pred_check_branch
          %401 = sbr.rel (%p399) target = $region64
        $region63: #{tpu_custom_call.1} parent=11 // pred_region
          _
        $region64: #{tpu_custom_call.1} parent=11 // pred_fallthru
          _
      $region12: #{tpu_custom_call.1} parent=5 // pred_fallthru
        _
      %p402 = scmp.lt.s32.totalorder %s23, 2
      // Predicated region
      $region65: #{tpu_custom_call.1} parent=5 // pred_check
        %p403 = pneg %p402
      $region66: #{tpu_custom_call.1} parent=5 // pred_check_branch
        %405 = sbr.rel (%p403) target = $region68
      $region67: #{tpu_custom_call.1} parent=5 // pred_region
        // Predicated region
        $region69: #{tpu_custom_call.1} parent=67 // pred_check
          %p406 = pneg %p43
        $region70: #{tpu_custom_call.1} parent=67 // pred_check_branch
          %408 = sbr.rel (%p406) target = $region72
        $region71: #{tpu_custom_call.1} parent=67 // pred_region
          %p409 = scmp.lt.s32.totalorder %s23, 1
          %s410 = scalar_select %p409, %s23, 1
          %s411 = smul.addr %s410, 2
          %s412 = scalar_lea.vmem %s0, %s411
        $region72: #{tpu_custom_call.1} parent=67 // pred_fallthru
          _
      $region68: #{tpu_custom_call.1} parent=5 // pred_fallthru
        _
      %p413 = scmp.le.s32.totalorder 1, %s23
      %p414 = scmp.lt.s32.totalorder %s23, 3
      %p415 = pnand %p413, %p414
      %p416 = pneg %p415
      // Predicated region
      $region73: #{tpu_custom_call.1} parent=5 // pred_check
        _
      $region74: #{tpu_custom_call.1} parent=5 // pred_check_branch
        %418 = sbr.rel (%p415) target = $region76
      $region75: #{tpu_custom_call.1} parent=5 // pred_region
        %s419 = ssub.s32 %s23, 1
        %p420 = scmp.lt.s32.totalorder %s28, 1
        %s421 = scalar_select %p420, %s28, 1
        %s422 = smul.addr %s421, 2
        %s423 = scalar_lea.vmem %s0, %s422
        %p424 = pneg %p49
        %p425 = pneg %p46
        %p426 = pneg %p70
        %p427 = pneg %p67
        %p428 = pneg %p91
        %p429 = pneg %p88
        %p430 = pneg %p112
        %p431 = pneg %p109
        %p432 = pneg %p133
        %p433 = pneg %p130
        %p434 = pneg %p154
        %p435 = pneg %p151
        %p436 = pneg %p175
        %p437 = pneg %p172
        %p438 = pneg %p196
        %p439 = pneg %p193
        %p440 = pneg %p217
        %p441 = pneg %p214
        %p442 = pneg %p238
        %p443 = pneg %p235
        %p444 = pneg %p259
        %p445 = pneg %p256
        %p446 = pneg %p280
        %p447 = pneg %p277
        %p448 = pneg %p301
        %p449 = pneg %p298
        %p450 = pneg %p322
        %p451 = pneg %p319
        %p452 = pneg %p348
        %p453 = pneg %p345
        %s454 = sand.u32 %s335, 1
        %s455 = scalar_lea.sflag [#allocation3], %s454
        %s456 = sand.u32 %s335, 1
        %s457 = smul.addr %s456, 8
        %s458 = scalar_lea.vmem [#allocation2], %s457
        %p459 = scmp.lt.s32.totalorder %s28, 1
        %s460 = scalar_select %p459, %s28, 1
        %s461 = smul.addr %s460, 2
        %s462 = scalar_lea.vmem %s0, %s461
        %v464 = vld [vmem:[%s1] sm:$0xf]
        %v465 = vld [vmem:[%s1 + $0x4] sm:$0x1]
        %v466 = vld [vmem:[%s462] sm:$0x3]
        %v467 = vld [vmem:[%s2] sm:$0xf]
        %v468 = vld [vmem:[%s2 + $0x4] sm:$0xf]
        %v469 = vld [vmem:[%s2 + $0x8] sm:$0xf]
        %v470 = vld [vmem:[%s2 + $0xc] sm:$0xf]
        %v471 = vld [vmem:[%s2 + $0x10] sm:$0xf]
        %v472 = vld [vmem:[%s2 + $0x14] sm:$0xf]
        %v473 = vld [vmem:[%s2 + $0x18] sm:$0xf]
        %v474 = vld [vmem:[%s2 + $0x1c] sm:$0xf]
        %v475 = vld [vmem:[%s2 + $0x20] sm:$0xf]
        %v476 = vld [vmem:[%s3] sm:$0xff]
        %478 = vst [vmem:[#allocation1] ss:$4 sm:$0xff] %v466
        %v479 = vld.sshfl [vmem:[#allocation1] sm:$0xff pattern:$0x73625140]
        %481 = vrot.lane.b32.xlu0 %v479, 73
        %v482 = vpop.permute.xlu0 %481
        %483 = vst [vmem:[#allocation1] ss:$4 sm:$0xff] %v466
        %v484 = vld.sshfl [vmem:[#allocation1] sm:$0xff pattern:$0x73625140]
        %486 = vrot.lane.b32.xlu0 %v484, 9
        %v487 = vpop.permute.xlu0 %486
        %vm488 = vcmask 72704
        %v491 = vsel %vm488, %v482, %v487
        %v494 = vpack.i.b16 %v464, %v464
        %v496 = vperm.slane %v494, 0
        %v497 = vunpack.c.l.bf16 %v491
        %v498 = vunpack.c.l.bf16 %v496
        %v499 = vmul.f32 %v497, %v498
        %v500 = vpack.c.bf16 %v499, %v499
        %501 = vst [vmem:[#allocation1] ss:$4 sm:$0xff] %v466
        %v502 = vld.sshfl [vmem:[#allocation1] sm:$0xff pattern:$0x73625140]
        %504 = vrot.lane.b32.xlu0 %v502, 72
        %v505 = vpop.permute.xlu0 %504
        %506 = vst [vmem:[#allocation1] ss:$4 sm:$0xff] %v466
        %v507 = vld.sshfl [vmem:[#allocation1] sm:$0xff pattern:$0x73625140]
        %509 = vrot.lane.b32.xlu0 %v507, 8
        %v510 = vpop.permute.xlu0 %509
        %vm511 = vcmask 64512
        %v514 = vsel %vm511, %v505, %v510
        %v516 = vshrl.u32 %v464, 16
        %v517 = vpack.i.b16 %v516, %v516
        %v519 = vperm.slane %v517, 0
        %v520 = vunpack.c.l.bf16 %v514
        %v521 = vunpack.c.l.bf16 %v519
        %v522 = vmul.f32 %v520, %v521
        %v523 = vpack.c.bf16 %v522, %v522
        %vm524 = vcmask 31744
        %v526 = vsel %vm524, %v468, 0
        %vm528 = vcmask 1041408
        %v530 = vsel %vm528, %v523, 0
        %532 = vmatpush.bf16.msra.mxu0 0
        %533 = vmatpush.bf16.msra.mxu0 0
        %534 = vmatpush.bf16.msra.mxu0 0
        %535 = vmatpush.bf16.msra.mxu0 0
        %536 = vmatpush.bf16.msra.mxu0 0
        %537 = vmatpush.bf16.msra.mxu0 0
        %538 = vmatpush.bf16.msra.mxu0 0
        %539 = vmatpush.bf16.msra.mxu0 %v530
        %540 = vmatmul.bf16.gmra.mxu0 %v526
        %v541 = vpop.f32.mrf.mxu0
        %v542 = vadd.f32 0.0, %v541
        %v543 = vpop.f32.mrf.mxu0
        %544 = vdwg.mxu0
        %v546 = vsel %vm524, %v467, 0
        %v549 = vsel %vm528, %v500, 0
        %551 = vmatpush.bf16.msra.mxu0 0
        %552 = vmatpush.bf16.msra.mxu0 0
        %553 = vmatpush.bf16.msra.mxu0 0
        %554 = vmatpush.bf16.msra.mxu0 0
        %555 = vmatpush.bf16.msra.mxu0 0
        %556 = vmatpush.bf16.msra.mxu0 0
        %557 = vmatpush.bf16.msra.mxu0 0
        %558 = vmatpush.bf16.msra.mxu0 %v549
        %559 = vmatmul.bf16.gmra.mxu0 %v546
        %v560 = vpop.f32.mrf.mxu0
        %v561 = vadd.f32 %v542, %v560
        %v562 = vpop.f32.mrf.mxu0
        %563 = vdwg.mxu0
        %564 = vst [vmem:[#allocation1] ss:$4 sm:$0xff] %v466
        %v565 = vld.sshfl [vmem:[#allocation1] sm:$0xff pattern:$0x73625140]
        %567 = vrot.lane.b32.xlu0 %v565, 71
        %v568 = vpop.permute.xlu0 %567
        %569 = vst [vmem:[#allocation1] ss:$4 sm:$0xff] %v466
        %v570 = vld.sshfl [vmem:[#allocation1] sm:$0xff pattern:$0x73625140]
        %572 = vrot.lane.b32.xlu0 %v570, 7
        %v573 = vpop.permute.xlu0 %572
        %vm574 = vcmask 56320
        %v577 = vsel %vm574, %v568, %v573
        %v579 = vperm.slane %v494, 1
        %v580 = vunpack.c.l.bf16 %v577
        %v581 = vunpack.c.l.bf16 %v579
        %v582 = vmul.f32 %v580, %v581
        %v583 = vpack.c.bf16 %v582, %v582
        %v585 = vsel %vm524, %v469, 0
        %v588 = vsel %vm528, %v583, 0
        %590 = vmatpush.bf16.msra.mxu0 0
        %591 = vmatpush.bf16.msra.mxu0 0
        %592 = vmatpush.bf16.msra.mxu0 0
        %593 = vmatpush.bf16.msra.mxu0 0
        %594 = vmatpush.bf16.msra.mxu0 0
        %595 = vmatpush.bf16.msra.mxu0 0
        %596 = vmatpush.bf16.msra.mxu0 0
        %597 = vmatpush.bf16.msra.mxu0 %v588
        %598 = vmatmul.bf16.gmra.mxu0 %v585
        %v599 = vpop.f32.mrf.mxu0
        %v600 = vadd.f32 0.0, %v599
        %v601 = vpop.f32.mrf.mxu0
        %602 = vdwg.mxu0
        %v603 = vadd.f32 %v561, %v600
        %604 = vst [vmem:[#allocation1] ss:$4 sm:$0xff] %v466
        %v605 = vld.sshfl [vmem:[#allocation1] sm:$0xff pattern:$0x73625140]
        %607 = vrot.lane.b32.xlu0 %v605, 65
        %v608 = vpop.permute.xlu0 %607
        %609 = vst [vmem:[#allocation1] ss:$4 sm:$0xff] %v466
        %v610 = vld.sshfl [vmem:[#allocation1] sm:$0xff pattern:$0x73625140]
        %612 = vrot.lane.b32.xlu0 %v610, 1
        %v613 = vpop.permute.xlu0 %612
        %vm614 = vcmask 7168
        %v617 = vsel %vm614, %v608, %v613
        %v619 = vperm.slane %v517, 1
        %v620 = vunpack.c.l.bf16 %v617
        %v621 = vunpack.c.l.bf16 %v619
        %v622 = vmul.f32 %v620, %v621
        %v623 = vpack.c.bf16 %v622, %v622
        %v625 = vsel %vm524, %v470, 0
        %v628 = vsel %vm528, %v623, 0
        %630 = vmatpush.bf16.msra.mxu0 0
        %631 = vmatpush.bf16.msra.mxu0 0
        %632 = vmatpush.bf16.msra.mxu0 0
        %633 = vmatpush.bf16.msra.mxu0 0
        %634 = vmatpush.bf16.msra.mxu0 0
        %635 = vmatpush.bf16.msra.mxu0 0
        %636 = vmatpush.bf16.msra.mxu0 0
        %637 = vmatpush.bf16.msra.mxu0 %v628
        %638 = vmatmul.bf16.gmra.mxu0 %v625
        %v639 = vpop.f32.mrf.mxu0
        %v640 = vadd.f32 0.0, %v639
        %v641 = vpop.f32.mrf.mxu0
        %642 = vdwg.mxu0
        %v643 = vadd.f32 %v603, %v640
        %v645 = vsel %vm524, %v471, 0
        %v647 = vsel %vm528, %v466, 0
        %649 = vmatpush.bf16.msra.mxu0 0
        %650 = vmatpush.bf16.msra.mxu0 0
        %651 = vmatpush.bf16.msra.mxu0 0
        %652 = vmatpush.bf16.msra.mxu0 0
        %653 = vmatpush.bf16.msra.mxu0 0
        %654 = vmatpush.bf16.msra.mxu0 0
        %655 = vmatpush.bf16.msra.mxu0 0
        %656 = vmatpush.bf16.msra.mxu0 %v647
        %657 = vmatmul.bf16.gmra.mxu0 %v645
        %v658 = vpop.f32.mrf.mxu0
        %v659 = vadd.f32 0.0, %v658
        %v660 = vpop.f32.mrf.mxu0
        %661 = vdwg.mxu0
        %v662 = vadd.f32 %v643, %v659
        %663 = vst [vmem:[#allocation1] ss:$4 sm:$0xff] %v466
        %v664 = vld.sshfl [vmem:[#allocation1] sm:$0xff pattern:$0x73625140]
        %666 = vrot.lane.b32.xlu0 %v664, 127
        %v667 = vpop.permute.xlu0 %666
        %668 = vst [vmem:[#allocation1] ss:$4 sm:$0xff] %v466
        %v669 = vld.sshfl [vmem:[#allocation1] sm:$0xff pattern:$0x73625140]
        %671 = vrot.lane.b32.xlu0 %v669, 63
        %v672 = vpop.permute.xlu0 %671
        %vm673 = vcmask 515072
        %v676 = vsel %vm673, %v667, %v672
        %v678 = vperm.slane %v517, 2
        %v679 = vunpack.c.l.bf16 %v676
        %v680 = vunpack.c.l.bf16 %v678
        %v681 = vmul.f32 %v679, %v680
        %v682 = vpack.c.bf16 %v681, %v681
        %v684 = vsel %vm524, %v472, 0
        %v687 = vsel %vm528, %v682, 0
        %689 = vmatpush.bf16.msra.mxu0 0
        %690 = vmatpush.bf16.msra.mxu0 0
        %691 = vmatpush.bf16.msra.mxu0 0
        %692 = vmatpush.bf16.msra.mxu0 0
        %693 = vmatpush.bf16.msra.mxu0 0
        %694 = vmatpush.bf16.msra.mxu0 0
        %695 = vmatpush.bf16.msra.mxu0 0
        %696 = vmatpush.bf16.msra.mxu0 %v687
        %697 = vmatmul.bf16.gmra.mxu0 %v684
        %v698 = vpop.f32.mrf.mxu0
        %v699 = vadd.f32 0.0, %v698
        %v700 = vpop.f32.mrf.mxu0
        %701 = vdwg.mxu0
        %v702 = vadd.f32 %v662, %v699
        %703 = vst [vmem:[#allocation1] ss:$4 sm:$0xff] %v466
        %v704 = vld.sshfl [vmem:[#allocation1] sm:$0xff pattern:$0x73625140]
        %706 = vrot.lane.b32.xlu0 %v704, 121
        %v707 = vpop.permute.xlu0 %706
        %708 = vst [vmem:[#allocation1] ss:$4 sm:$0xff] %v466
        %v709 = vld.sshfl [vmem:[#allocation1] sm:$0xff pattern:$0x73625140]
        %711 = vrot.lane.b32.xlu0 %v709, 57
        %v712 = vpop.permute.xlu0 %711
        %vm713 = vcmask 465920
        %v716 = vsel %vm713, %v707, %v712
        %v718 = vperm.slane %v494, 3
        %v719 = vunpack.c.l.bf16 %v716
        %v720 = vunpack.c.l.bf16 %v718
        %v721 = vmul.f32 %v719, %v720
        %v722 = vpack.c.bf16 %v721, %v721
        %v724 = vsel %vm524, %v473, 0
        %v727 = vsel %vm528, %v722, 0
        %729 = vmatpush.bf16.msra.mxu0 0
        %730 = vmatpush.bf16.msra.mxu0 0
        %731 = vmatpush.bf16.msra.mxu0 0
        %732 = vmatpush.bf16.msra.mxu0 0
        %733 = vmatpush.bf16.msra.mxu0 0
        %734 = vmatpush.bf16.msra.mxu0 0
        %735 = vmatpush.bf16.msra.mxu0 0
        %736 = vmatpush.bf16.msra.mxu0 %v727
        %737 = vmatmul.bf16.gmra.mxu0 %v724
        %v738 = vpop.f32.mrf.mxu0
        %v739 = vadd.f32 0.0, %v738
        %v740 = vpop.f32.mrf.mxu0
        %741 = vdwg.mxu0
        %v742 = vadd.f32 %v702, %v739
        %743 = vst [vmem:[#allocation1] ss:$4 sm:$0xff] %v466
        %v744 = vld.sshfl [vmem:[#allocation1] sm:$0xff pattern:$0x73625140]
        %746 = vrot.lane.b32.xlu0 %v744, 120
        %v747 = vpop.permute.xlu0 %746
        %748 = vst [vmem:[#allocation1] ss:$4 sm:$0xff] %v466
        %v749 = vld.sshfl [vmem:[#allocation1] sm:$0xff pattern:$0x73625140]
        %751 = vrot.lane.b32.xlu0 %v749, 56
        %v752 = vpop.permute.xlu0 %751
        %vm753 = vcmask 457728
        %v756 = vsel %vm753, %v747, %v752
        %v758 = vperm.slane %v517, 3
        %v759 = vunpack.c.l.bf16 %v756
        %v760 = vunpack.c.l.bf16 %v758
        %v761 = vmul.f32 %v759, %v760
        %v762 = vpack.c.bf16 %v761, %v761
        %v764 = vsel %vm524, %v474, 0
        %v767 = vsel %vm528, %v762, 0
        %769 = vmatpush.bf16.msra.mxu0 0
        %770 = vmatpush.bf16.msra.mxu0 0
        %771 = vmatpush.bf16.msra.mxu0 0
        %772 = vmatpush.bf16.msra.mxu0 0
        %773 = vmatpush.bf16.msra.mxu0 0
        %774 = vmatpush.bf16.msra.mxu0 0
        %775 = vmatpush.bf16.msra.mxu0 0
        %776 = vmatpush.bf16.msra.mxu0 %v767
        %777 = vmatmul.bf16.gmra.mxu0 %v764
        %v778 = vpop.f32.mrf.mxu0
        %v779 = vadd.f32 0.0, %v778
        %v780 = vpop.f32.mrf.mxu0
        %781 = vdwg.mxu0
        %v782 = vadd.f32 %v742, %v779
        %783 = vst [vmem:[#allocation1] ss:$4 sm:$0xff] %v466
        %v784 = vld.sshfl [vmem:[#allocation1] sm:$0xff pattern:$0x73625140]
        %786 = vrot.lane.b32.xlu0 %v784, 119
        %v787 = vpop.permute.xlu0 %786
        %788 = vst [vmem:[#allocation1] ss:$4 sm:$0xff] %v466
        %v789 = vld.sshfl [vmem:[#allocation1] sm:$0xff pattern:$0x73625140]
        %791 = vrot.lane.b32.xlu0 %v789, 55
        %v792 = vpop.permute.xlu0 %791
        %vm793 = vcmask 449536
        %v796 = vsel %vm793, %v787, %v792
        %v799 = vpack.i.b16 %v465, %v465
        %v801 = vperm.slane %v799, 0
        %v802 = vunpack.c.l.bf16 %v796
        %v803 = vunpack.c.l.bf16 %v801
        %v804 = vmul.f32 %v802, %v803
        %v805 = vpack.c.bf16 %v804, %v804
        %v807 = vsel %vm524, %v475, 0
        %v810 = vsel %vm528, %v805, 0
        %812 = vmatpush.bf16.msra.mxu0 0
        %813 = vmatpush.bf16.msra.mxu0 0
        %814 = vmatpush.bf16.msra.mxu0 0
        %815 = vmatpush.bf16.msra.mxu0 0
        %816 = vmatpush.bf16.msra.mxu0 0
        %817 = vmatpush.bf16.msra.mxu0 0
        %818 = vmatpush.bf16.msra.mxu0 0
        %819 = vmatpush.bf16.msra.mxu0 %v810
        %820 = vmatmul.bf16.gmra.mxu0 %v807
        %v821 = vpop.f32.mrf.mxu0
        %v822 = vadd.f32 0.0, %v821
        %v823 = vpop.f32.mrf.mxu0
        %824 = vdwg.mxu0
        %v825 = vadd.f32 %v782, %v822
        %827 = vset.pattern.permute.xlu0 0
        %828 = vperm.xlu0 %827, %v476
        %v829 = vpop.permute.xlu0 %828
        %v831 = vadd.f32 %v825, %v829
        %v832 = vmax.f32 %v831, 0.0
        %v833 = vpack.c.bf16 %v832, %v832
        %v834 = vld [vmem:[%s4] sm:$0xf]
        %v835 = vld [vmem:[%s4 + $0x4] sm:$0xf]
        %v836 = vld [vmem:[%s4 + $0x8] sm:$0xf]
        %v837 = vld [vmem:[%s4 + $0xc] sm:$0xf]
        %v838 = vld [vmem:[%s4 + $0x10] sm:$0xf]
        %v839 = vld [vmem:[%s4 + $0x14] sm:$0xf]
        %v840 = vld [vmem:[%s4 + $0x18] sm:$0xf]
        %v841 = vld [vmem:[%s4 + $0x1c] sm:$0xf]
        %v842 = vld [vmem:[%s4 + $0x20] sm:$0xf]
        %v843 = vld [vmem:[%s5] sm:$0xff]
        %v845 = vunpack.c.l.b16 %v833
        %v846 = vpack.c.b16 %v845, %v845
        %847 = vrot.lane.b32.xlu0 %v846, 73
        %v848 = vpop.permute.xlu0 %847
        %849 = vrot.lane.b32.xlu0 %v846, 9
        %v850 = vpop.permute.xlu0 %849
        %v853 = vsel %vm488, %v848, %v850
        %v855 = vunpack.c.l.bf16 %v853
        %v856 = vmul.f32 %v855, %v498
        %v857 = vpack.c.bf16 %v856, %v856
        %858 = vrot.lane.b32.xlu0 %v846, 72
        %v859 = vpop.permute.xlu0 %858
        %860 = vrot.lane.b32.xlu0 %v846, 8
        %v861 = vpop.permute.xlu0 %860
        %v864 = vsel %vm511, %v859, %v861
        %v866 = vunpack.c.l.bf16 %v864
        %v867 = vmul.f32 %v866, %v521
        %v868 = vpack.c.bf16 %v867, %v867
        %v870 = vsel %vm511, %v835, 0
        %vm872 = vcmask 1043456
        %v874 = vsel %vm872, %v868, 0
        %876 = vmatpush.bf16.msra.mxu0 0
        %877 = vmatpush.bf16.msra.mxu0 0
        %878 = vmatpush.bf16.msra.mxu0 0
        %879 = vmatpush.bf16.msra.mxu0 0
        %880 = vmatpush.bf16.msra.mxu0 0
        %881 = vmatpush.bf16.msra.mxu0 0
        %882 = vmatpush.bf16.msra.mxu0 0
        %883 = vmatpush.bf16.msra.mxu0 %v874
        %884 = vmatmul.bf16.gmra.mxu0 %v870
        %v885 = vpop.f32.mrf.mxu0
        %v886 = vadd.f32 0.0, %v885
        %v887 = vpop.f32.mrf.mxu0
        %888 = vdwg.mxu0
        %v890 = vsel %vm511, %v834, 0
        %v893 = vsel %vm872, %v857, 0
        %895 = vmatpush.bf16.msra.mxu0 0
        %896 = vmatpush.bf16.msra.mxu0 0
        %897 = vmatpush.bf16.msra.mxu0 0
        %898 = vmatpush.bf16.msra.mxu0 0
        %899 = vmatpush.bf16.msra.mxu0 0
        %900 = vmatpush.bf16.msra.mxu0 0
        %901 = vmatpush.bf16.msra.mxu0 0
        %902 = vmatpush.bf16.msra.mxu0 %v893
        %903 = vmatmul.bf16.gmra.mxu0 %v890
        %v904 = vpop.f32.mrf.mxu0
        %v905 = vadd.f32 %v886, %v904
        %v906 = vpop.f32.mrf.mxu0
        %907 = vdwg.mxu0
        %908 = vrot.lane.b32.xlu0 %v846, 71
        %v909 = vpop.permute.xlu0 %908
        %910 = vrot.lane.b32.xlu0 %v846, 7
        %v911 = vpop.permute.xlu0 %910
        %v914 = vsel %vm574, %v909, %v911
        %v916 = vunpack.c.l.bf16 %v914
        %v917 = vmul.f32 %v916, %v581
        %v918 = vpack.c.bf16 %v917, %v917
        %v920 = vsel %vm511, %v836, 0
        %v923 = vsel %vm872, %v918, 0
        %925 = vmatpush.bf16.msra.mxu0 0
        %926 = vmatpush.bf16.msra.mxu0 0
        %927 = vmatpush.bf16.msra.mxu0 0
        %928 = vmatpush.bf16.msra.mxu0 0
        %929 = vmatpush.bf16.msra.mxu0 0
        %930 = vmatpush.bf16.msra.mxu0 0
        %931 = vmatpush.bf16.msra.mxu0 0
        %932 = vmatpush.bf16.msra.mxu0 %v923
        %933 = vmatmul.bf16.gmra.mxu0 %v920
        %v934 = vpop.f32.mrf.mxu0
        %v935 = vadd.f32 0.0, %v934
        %v936 = vpop.f32.mrf.mxu0
        %937 = vdwg.mxu0
        %v938 = vadd.f32 %v905, %v935
        %939 = vrot.lane.b32.xlu0 %v846, 65
        %v940 = vpop.permute.xlu0 %939
        %941 = vrot.lane.b32.xlu0 %v846, 1
        %v942 = vpop.permute.xlu0 %941
        %v945 = vsel %vm614, %v940, %v942
        %v947 = vunpack.c.l.bf16 %v945
        %v948 = vmul.f32 %v947, %v621
        %v949 = vpack.c.bf16 %v948, %v948
        %v951 = vsel %vm511, %v837, 0
        %v954 = vsel %vm872, %v949, 0
        %956 = vmatpush.bf16.msra.mxu0 0
        %957 = vmatpush.bf16.msra.mxu0 0
        %958 = vmatpush.bf16.msra.mxu0 0
        %959 = vmatpush.bf16.msra.mxu0 0
        %960 = vmatpush.bf16.msra.mxu0 0
        %961 = vmatpush.bf16.msra.mxu0 0
        %962 = vmatpush.bf16.msra.mxu0 0
        %963 = vmatpush.bf16.msra.mxu0 %v954
        %964 = vmatmul.bf16.gmra.mxu0 %v951
        %v965 = vpop.f32.mrf.mxu0
        %v966 = vadd.f32 0.0, %v965
        %v967 = vpop.f32.mrf.mxu0
        %968 = vdwg.mxu0
        %v969 = vadd.f32 %v938, %v966
        %v971 = vsel %vm511, %v838, 0
        %v974 = vsel %vm872, %v833, 0
        %976 = vmatpush.bf16.msra.mxu0 0
        %977 = vmatpush.bf16.msra.mxu0 0
        %978 = vmatpush.bf16.msra.mxu0 0
        %979 = vmatpush.bf16.msra.mxu0 0
        %980 = vmatpush.bf16.msra.mxu0 0
        %981 = vmatpush.bf16.msra.mxu0 0
        %982 = vmatpush.bf16.msra.mxu0 0
        %983 = vmatpush.bf16.msra.mxu0 %v974
        %984 = vmatmul.bf16.gmra.mxu0 %v971
        %v985 = vpop.f32.mrf.mxu0
        %v986 = vadd.f32 0.0, %v985
        %v987 = vpop.f32.mrf.mxu0
        %988 = vdwg.mxu0
        %v989 = vadd.f32 %v969, %v986
        %990 = vrot.lane.b32.xlu0 %v846, 127
        %v991 = vpop.permute.xlu0 %990
        %992 = vrot.lane.b32.xlu0 %v846, 63
        %v993 = vpop.permute.xlu0 %992
        %v996 = vsel %vm673, %v991, %v993
        %v998 = vunpack.c.l.bf16 %v996
        %v999 = vmul.f32 %v998, %v680
        %v1000 = vpack.c.bf16 %v999, %v999
        %v1002 = vsel %vm511, %v839, 0
        %v1005 = vsel %vm872, %v1000, 0
        %1007 = vmatpush.bf16.msra.mxu0 0
        %1008 = vmatpush.bf16.msra.mxu0 0
        %1009 = vmatpush.bf16.msra.mxu0 0
        %1010 = vmatpush.bf16.msra.mxu0 0
        %1011 = vmatpush.bf16.msra.mxu0 0
        %1012 = vmatpush.bf16.msra.mxu0 0
        %1013 = vmatpush.bf16.msra.mxu0 0
        %1014 = vmatpush.bf16.msra.mxu0 %v1005
        %1015 = vmatmul.bf16.gmra.mxu0 %v1002
        %v1016 = vpop.f32.mrf.mxu0
        %v1017 = vadd.f32 0.0, %v1016
        %v1018 = vpop.f32.mrf.mxu0
        %1019 = vdwg.mxu0
        %v1020 = vadd.f32 %v989, %v1017
        %1021 = vrot.lane.b32.xlu0 %v846, 121
        %v1022 = vpop.permute.xlu0 %1021
        %1023 = vrot.lane.b32.xlu0 %v846, 57
        %v1024 = vpop.permute.xlu0 %1023
        %v1027 = vsel %vm713, %v1022, %v1024
        %v1029 = vunpack.c.l.bf16 %v1027
        %v1030 = vmul.f32 %v1029, %v720
        %v1031 = vpack.c.bf16 %v1030, %v1030
        %v1033 = vsel %vm511, %v840, 0
        %v1036 = vsel %vm872, %v1031, 0
        %1038 = vmatpush.bf16.msra.mxu0 0
        %1039 = vmatpush.bf16.msra.mxu0 0
        %1040 = vmatpush.bf16.msra.mxu0 0
        %1041 = vmatpush.bf16.msra.mxu0 0
        %1042 = vmatpush.bf16.msra.mxu0 0
        %1043 = vmatpush.bf16.msra.mxu0 0
        %1044 = vmatpush.bf16.msra.mxu0 0
        %1045 = vmatpush.bf16.msra.mxu0 %v1036
        %1046 = vmatmul.bf16.gmra.mxu0 %v1033
        %v1047 = vpop.f32.mrf.mxu0
        %v1048 = vadd.f32 0.0, %v1047
        %v1049 = vpop.f32.mrf.mxu0
        %1050 = vdwg.mxu0
        %v1051 = vadd.f32 %v1020, %v1048
        %1052 = vrot.lane.b32.xlu0 %v846, 120
        %v1053 = vpop.permute.xlu0 %1052
        %1054 = vrot.lane.b32.xlu0 %v846, 56
        %v1055 = vpop.permute.xlu0 %1054
        %v1058 = vsel %vm753, %v1053, %v1055
        %v1060 = vunpack.c.l.bf16 %v1058
        %v1061 = vmul.f32 %v1060, %v760
        %v1062 = vpack.c.bf16 %v1061, %v1061
        %v1064 = vsel %vm511, %v841, 0
        %v1067 = vsel %vm872, %v1062, 0
        %1069 = vmatpush.bf16.msra.mxu0 0
        %1070 = vmatpush.bf16.msra.mxu0 0
        %1071 = vmatpush.bf16.msra.mxu0 0
        %1072 = vmatpush.bf16.msra.mxu0 0
        %1073 = vmatpush.bf16.msra.mxu0 0
        %1074 = vmatpush.bf16.msra.mxu0 0
        %1075 = vmatpush.bf16.msra.mxu0 0
        %1076 = vmatpush.bf16.msra.mxu0 %v1067
        %1077 = vmatmul.bf16.gmra.mxu0 %v1064
        %v1078 = vpop.f32.mrf.mxu0
        %v1079 = vadd.f32 0.0, %v1078
        %v1080 = vpop.f32.mrf.mxu0
        %1081 = vdwg.mxu0
        %v1082 = vadd.f32 %v1051, %v1079
        %1083 = vrot.lane.b32.xlu0 %v846, 119
        %v1084 = vpop.permute.xlu0 %1083
        %1085 = vrot.lane.b32.xlu0 %v846, 55
        %v1086 = vpop.permute.xlu0 %1085
        %v1089 = vsel %vm793, %v1084, %v1086
        %v1091 = vunpack.c.l.bf16 %v1089
        %v1092 = vmul.f32 %v1091, %v803
        %v1093 = vpack.c.bf16 %v1092, %v1092
        %v1095 = vsel %vm511, %v842, 0
        %v1098 = vsel %vm872, %v1093, 0
        %1100 = vmatpush.bf16.msra.mxu0 0
        %1101 = vmatpush.bf16.msra.mxu0 0
        %1102 = vmatpush.bf16.msra.mxu0 0
        %1103 = vmatpush.bf16.msra.mxu0 0
        %1104 = vmatpush.bf16.msra.mxu0 0
        %1105 = vmatpush.bf16.msra.mxu0 0
        %1106 = vmatpush.bf16.msra.mxu0 0
        %1107 = vmatpush.bf16.msra.mxu0 %v1098
        %1108 = vmatmul.bf16.gmra.mxu0 %v1095
        %v1109 = vpop.f32.mrf.mxu0
        %v1110 = vadd.f32 0.0, %v1109
        %v1111 = vpop.f32.mrf.mxu0
        %1112 = vdwg.mxu0
        %v1113 = vadd.f32 %v1082, %v1110
        %1115 = vset.pattern.permute.xlu0 0
        %1116 = vperm.xlu0 %1115, %v843
        %v1117 = vpop.permute.xlu0 %1116
        %v1119 = vadd.f32 %v1113, %v1117
        %v1120 = vmax.f32 %v1119, 0.0
        %v1121 = vpack.c.bf16 %v1120, %v1120
        %v1122 = vld [vmem:[%s6] sm:$0xf]
        %v1123 = vld [vmem:[%s7] sm:$0xff]
        %v1125 = vunpack.c.l.b16 %v1122
        %v1126 = vpack.c.b16 %v1125, %v1125
        %1127 = vrot.lane.b32.xlu0 %v1126, 120
        %v1128 = vpop.permute.xlu0 %1127
        %v1130 = vsel %vm511, %v1128, 0
        %v1133 = vsel %vm872, %v1121, 0
        %1135 = vmatpush.bf16.msra.mxu0 0
        %1136 = vmatpush.bf16.msra.mxu0 0
        %1137 = vmatpush.bf16.msra.mxu0 0
        %1138 = vmatpush.bf16.msra.mxu0 0
        %1139 = vmatpush.bf16.msra.mxu0 0
        %1140 = vmatpush.bf16.msra.mxu0 0
        %1141 = vmatpush.bf16.msra.mxu0 0
        %1142 = vmatpush.bf16.msra.mxu0 %v1133
        %1143 = vmatmul.bf16.gmra.mxu0 %v1130
        %v1144 = vpop.f32.mrf.mxu0
        %v1145 = vadd.f32 0.0, %v1144
        %v1146 = vpop.f32.mrf.mxu0
        %1147 = vdwg.mxu0
        %v1149 = vsel %vm511, %v1122, 0
        %1151 = vmatpush.bf16.msra.mxu0 0
        %1152 = vmatpush.bf16.msra.mxu0 0
        %1153 = vmatpush.bf16.msra.mxu0 0
        %1154 = vmatpush.bf16.msra.mxu0 0
        %1155 = vmatpush.bf16.msra.mxu0 0
        %1156 = vmatpush.bf16.msra.mxu0 0
        %1157 = vmatpush.bf16.msra.mxu0 0
        %1158 = vmatpush.bf16.msra.mxu0 %v974
        %1159 = vmatmul.bf16.gmra.mxu0 %v1149
        %v1160 = vpop.f32.mrf.mxu0
        %v1161 = vadd.f32 %v1145, %v1160
        %v1162 = vpop.f32.mrf.mxu0
        %1163 = vdwg.mxu0
        %1165 = vset.pattern.permute.xlu0 0
        %1166 = vperm.xlu0 %1165, %v1123
        %v1167 = vpop.permute.xlu0 %1166
        %v1169 = vadd.f32 %v1161, %v1167
        %v1170 = vld [vmem:[%s8] sm:$0xf]
        %v1171 = vld [vmem:[%s8 + $0x4] sm:$0xf]
        %v1172 = vld [vmem:[%s8 + $0x8] sm:$0xf]
        %v1173 = vld [vmem:[%s8 + $0xc] sm:$0xf]
        %v1174 = vld [vmem:[%s8 + $0x10] sm:$0xf]
        %v1175 = vld [vmem:[%s8 + $0x14] sm:$0xf]
        %v1176 = vld [vmem:[%s8 + $0x18] sm:$0xf]
        %v1177 = vld [vmem:[%s8 + $0x1c] sm:$0xf]
        %v1178 = vld [vmem:[%s8 + $0x20] sm:$0xf]
        %v1179 = vld [vmem:[%s9] sm:$0xff]
        %v1180 = vpack.c.bf16 %v1169, %v1169
        %v1182 = vunpack.c.l.b16 %v1180
        %v1183 = vpack.c.b16 %v1182, %v1182
        %1184 = vrot.lane.b32.xlu0 %v1183, 73
        %v1185 = vpop.permute.xlu0 %1184
        %1186 = vrot.lane.b32.xlu0 %v1183, 9
        %v1187 = vpop.permute.xlu0 %1186
        %v1190 = vsel %vm488, %v1185, %v1187
        %v1192 = vunpack.c.l.bf16 %v1190
        %v1193 = vmul.f32 %v1192, %v498
        %v1194 = vpack.c.bf16 %v1193, %v1193
        %1195 = vrot.lane.b32.xlu0 %v1183, 72
        %v1196 = vpop.permute.xlu0 %1195
        %1197 = vrot.lane.b32.xlu0 %v1183, 8
        %v1198 = vpop.permute.xlu0 %1197
        %v1201 = vsel %vm511, %v1196, %v1198
        %v1203 = vunpack.c.l.bf16 %v1201
        %v1204 = vmul.f32 %v1203, %v521
        %v1205 = vpack.c.bf16 %v1204, %v1204
        %v1207 = vsel %vm511, %v1171, 0
        %v1210 = vsel %vm872, %v1205, 0
        %1212 = vmatpush.bf16.msra.mxu0 0
        %1213 = vmatpush.bf16.msra.mxu0 0
        %1214 = vmatpush.bf16.msra.mxu0 0
        %1215 = vmatpush.bf16.msra.mxu0 0
        %1216 = vmatpush.bf16.msra.mxu0 0
        %1217 = vmatpush.bf16.msra.mxu0 0
        %1218 = vmatpush.bf16.msra.mxu0 0
        %1219 = vmatpush.bf16.msra.mxu0 %v1210
        %1220 = vmatmul.bf16.gmra.mxu0 %v1207
        %v1221 = vpop.f32.mrf.mxu0
        %v1222 = vadd.f32 0.0, %v1221
        %v1223 = vpop.f32.mrf.mxu0
        %1224 = vdwg.mxu0
        %v1226 = vsel %vm511, %v1170, 0
        %v1229 = vsel %vm872, %v1194, 0
        %1231 = vmatpush.bf16.msra.mxu0 0
        %1232 = vmatpush.bf16.msra.mxu0 0
        %1233 = vmatpush.bf16.msra.mxu0 0
        %1234 = vmatpush.bf16.msra.mxu0 0
        %1235 = vmatpush.bf16.msra.mxu0 0
        %1236 = vmatpush.bf16.msra.mxu0 0
        %1237 = vmatpush.bf16.msra.mxu0 0
        %1238 = vmatpush.bf16.msra.mxu0 %v1229
        %1239 = vmatmul.bf16.gmra.mxu0 %v1226
        %v1240 = vpop.f32.mrf.mxu0
        %v1241 = vadd.f32 %v1222, %v1240
        %v1242 = vpop.f32.mrf.mxu0
        %1243 = vdwg.mxu0
        %1244 = vrot.lane.b32.xlu0 %v1183, 71
        %v1245 = vpop.permute.xlu0 %1244
        %1246 = vrot.lane.b32.xlu0 %v1183, 7
        %v1247 = vpop.permute.xlu0 %1246
        %v1250 = vsel %vm574, %v1245, %v1247
        %v1252 = vunpack.c.l.bf16 %v1250
        %v1253 = vmul.f32 %v1252, %v581
        %v1254 = vpack.c.bf16 %v1253, %v1253
        %v1256 = vsel %vm511, %v1172, 0
        %v1259 = vsel %vm872, %v1254, 0
        %1261 = vmatpush.bf16.msra.mxu0 0
        %1262 = vmatpush.bf16.msra.mxu0 0
        %1263 = vmatpush.bf16.msra.mxu0 0
        %1264 = vmatpush.bf16.msra.mxu0 0
        %1265 = vmatpush.bf16.msra.mxu0 0
        %1266 = vmatpush.bf16.msra.mxu0 0
        %1267 = vmatpush.bf16.msra.mxu0 0
        %1268 = vmatpush.bf16.msra.mxu0 %v1259
        %1269 = vmatmul.bf16.gmra.mxu0 %v1256
        %v1270 = vpop.f32.mrf.mxu0
        %v1271 = vadd.f32 0.0, %v1270
        %v1272 = vpop.f32.mrf.mxu0
        %1273 = vdwg.mxu0
        %v1274 = vadd.f32 %v1241, %v1271
        %1275 = vrot.lane.b32.xlu0 %v1183, 65
        %v1276 = vpop.permute.xlu0 %1275
        %1277 = vrot.lane.b32.xlu0 %v1183, 1
        %v1278 = vpop.permute.xlu0 %1277
        %v1281 = vsel %vm614, %v1276, %v1278
        %v1283 = vunpack.c.l.bf16 %v1281
        %v1284 = vmul.f32 %v1283, %v621
        %v1285 = vpack.c.bf16 %v1284, %v1284
        %v1287 = vsel %vm511, %v1173, 0
        %v1290 = vsel %vm872, %v1285, 0
        %1292 = vmatpush.bf16.msra.mxu0 0
        %1293 = vmatpush.bf16.msra.mxu0 0
        %1294 = vmatpush.bf16.msra.mxu0 0
        %1295 = vmatpush.bf16.msra.mxu0 0
        %1296 = vmatpush.bf16.msra.mxu0 0
        %1297 = vmatpush.bf16.msra.mxu0 0
        %1298 = vmatpush.bf16.msra.mxu0 0
        %1299 = vmatpush.bf16.msra.mxu0 %v1290
        %1300 = vmatmul.bf16.gmra.mxu0 %v1287
        %v1301 = vpop.f32.mrf.mxu0
        %v1302 = vadd.f32 0.0, %v1301
        %v1303 = vpop.f32.mrf.mxu0
        %1304 = vdwg.mxu0
        %v1305 = vadd.f32 %v1274, %v1302
        %v1307 = vsel %vm511, %v1174, 0
        %v1310 = vsel %vm872, %v1180, 0
        %1312 = vmatpush.bf16.msra.mxu0 0
        %1313 = vmatpush.bf16.msra.mxu0 0
        %1314 = vmatpush.bf16.msra.mxu0 0
        %1315 = vmatpush.bf16.msra.mxu0 0
        %1316 = vmatpush.bf16.msra.mxu0 0
        %1317 = vmatpush.bf16.msra.mxu0 0
        %1318 = vmatpush.bf16.msra.mxu0 0
        %1319 = vmatpush.bf16.msra.mxu0 %v1310
        %1320 = vmatmul.bf16.gmra.mxu0 %v1307
        %v1321 = vpop.f32.mrf.mxu0
        %v1322 = vadd.f32 0.0, %v1321
        %v1323 = vpop.f32.mrf.mxu0
        %1324 = vdwg.mxu0
        %v1325 = vadd.f32 %v1305, %v1322
        %1326 = vrot.lane.b32.xlu0 %v1183, 127
        %v1327 = vpop.permute.xlu0 %1326
        %1328 = vrot.lane.b32.xlu0 %v1183, 63
        %v1329 = vpop.permute.xlu0 %1328
        %v1332 = vsel %vm673, %v1327, %v1329
        %v1334 = vunpack.c.l.bf16 %v1332
        %v1335 = vmul.f32 %v1334, %v680
        %v1336 = vpack.c.bf16 %v1335, %v1335
        %v1338 = vsel %vm511, %v1175, 0
        %v1341 = vsel %vm872, %v1336, 0
        %1343 = vmatpush.bf16.msra.mxu0 0
        %1344 = vmatpush.bf16.msra.mxu0 0
        %1345 = vmatpush.bf16.msra.mxu0 0
        %1346 = vmatpush.bf16.msra.mxu0 0
        %1347 = vmatpush.bf16.msra.mxu0 0
        %1348 = vmatpush.bf16.msra.mxu0 0
        %1349 = vmatpush.bf16.msra.mxu0 0
        %1350 = vmatpush.bf16.msra.mxu0 %v1341
        %1351 = vmatmul.bf16.gmra.mxu0 %v1338
        %v1352 = vpop.f32.mrf.mxu0
        %v1353 = vadd.f32 0.0, %v1352
        %v1354 = vpop.f32.mrf.mxu0
        %1355 = vdwg.mxu0
        %v1356 = vadd.f32 %v1325, %v1353
        %1357 = vrot.lane.b32.xlu0 %v1183, 121
        %v1358 = vpop.permute.xlu0 %1357
        %1359 = vrot.lane.b32.xlu0 %v1183, 57
        %v1360 = vpop.permute.xlu0 %1359
        %v1363 = vsel %vm713, %v1358, %v1360
        %v1365 = vunpack.c.l.bf16 %v1363
        %v1366 = vmul.f32 %v1365, %v720
        %v1367 = vpack.c.bf16 %v1366, %v1366
        %v1369 = vsel %vm511, %v1176, 0
        %v1372 = vsel %vm872, %v1367, 0
        %1374 = vmatpush.bf16.msra.mxu0 0
        %1375 = vmatpush.bf16.msra.mxu0 0
        %1376 = vmatpush.bf16.msra.mxu0 0
        %1377 = vmatpush.bf16.msra.mxu0 0
        %1378 = vmatpush.bf16.msra.mxu0 0
        %1379 = vmatpush.bf16.msra.mxu0 0
        %1380 = vmatpush.bf16.msra.mxu0 0
        %1381 = vmatpush.bf16.msra.mxu0 %v1372
        %1382 = vmatmul.bf16.gmra.mxu0 %v1369
        %v1383 = vpop.f32.mrf.mxu0
        %v1384 = vadd.f32 0.0, %v1383
        %v1385 = vpop.f32.mrf.mxu0
        %1386 = vdwg.mxu0
        %v1387 = vadd.f32 %v1356, %v1384
        %1388 = vrot.lane.b32.xlu0 %v1183, 120
        %v1389 = vpop.permute.xlu0 %1388
        %1390 = vrot.lane.b32.xlu0 %v1183, 56
        %v1391 = vpop.permute.xlu0 %1390
        %v1394 = vsel %vm753, %v1389, %v1391
        %v1396 = vunpack.c.l.bf16 %v1394
        %v1397 = vmul.f32 %v1396, %v760
        %v1398 = vpack.c.bf16 %v1397, %v1397
        %v1400 = vsel %vm511, %v1177, 0
        %v1403 = vsel %vm872, %v1398, 0
        %1405 = vmatpush.bf16.msra.mxu0 0
        %1406 = vmatpush.bf16.msra.mxu0 0
        %1407 = vmatpush.bf16.msra.mxu0 0
        %1408 = vmatpush.bf16.msra.mxu0 0
        %1409 = vmatpush.bf16.msra.mxu0 0
        %1410 = vmatpush.bf16.msra.mxu0 0
        %1411 = vmatpush.bf16.msra.mxu0 0
        %1412 = vmatpush.bf16.msra.mxu0 %v1403
        %1413 = vmatmul.bf16.gmra.mxu0 %v1400
        %v1414 = vpop.f32.mrf.mxu0
        %v1415 = vadd.f32 0.0, %v1414
        %v1416 = vpop.f32.mrf.mxu0
        %1417 = vdwg.mxu0
        %v1418 = vadd.f32 %v1387, %v1415
        %1419 = vrot.lane.b32.xlu0 %v1183, 119
        %v1420 = vpop.permute.xlu0 %1419
        %1421 = vrot.lane.b32.xlu0 %v1183, 55
        %v1422 = vpop.permute.xlu0 %1421
        %v1425 = vsel %vm793, %v1420, %v1422
        %v1427 = vunpack.c.l.bf16 %v1425
        %v1428 = vmul.f32 %v1427, %v803
        %v1429 = vpack.c.bf16 %v1428, %v1428
        %v1431 = vsel %vm511, %v1178, 0
        %v1434 = vsel %vm872, %v1429, 0
        %1436 = vmatpush.bf16.msra.mxu0 0
        %1437 = vmatpush.bf16.msra.mxu0 0
        %1438 = vmatpush.bf16.msra.mxu0 0
        %1439 = vmatpush.bf16.msra.mxu0 0
        %1440 = vmatpush.bf16.msra.mxu0 0
        %1441 = vmatpush.bf16.msra.mxu0 0
        %1442 = vmatpush.bf16.msra.mxu0 0
        %1443 = vmatpush.bf16.msra.mxu0 %v1434
        %1444 = vmatmul.bf16.gmra.mxu0 %v1431
        %v1445 = vpop.f32.mrf.mxu0
        %v1446 = vadd.f32 0.0, %v1445
        %v1447 = vpop.f32.mrf.mxu0
        %1448 = vdwg.mxu0
        %v1449 = vadd.f32 %v1418, %v1446
        %1451 = vset.pattern.permute.xlu0 0
        %1452 = vperm.xlu0 %1451, %v1179
        %v1453 = vpop.permute.xlu0 %1452
        %v1455 = vadd.f32 %v1449, %v1453
        %v1456 = vmax.f32 %v1455, 0.0
        %v1457 = vpack.c.bf16 %v1456, %v1456
        %v1458 = vld [vmem:[%s10] sm:$0xf]
        %v1459 = vld [vmem:[%s10 + $0x4] sm:$0xf]
        %v1460 = vld [vmem:[%s10 + $0x8] sm:$0xf]
        %v1461 = vld [vmem:[%s10 + $0xc] sm:$0xf]
        %v1462 = vld [vmem:[%s10 + $0x10] sm:$0xf]
        %v1463 = vld [vmem:[%s10 + $0x14] sm:$0xf]
        %v1464 = vld [vmem:[%s10 + $0x18] sm:$0xf]
        %v1465 = vld [vmem:[%s10 + $0x1c] sm:$0xf]
        %v1466 = vld [vmem:[%s10 + $0x20] sm:$0xf]
        %v1467 = vld [vmem:[%s11] sm:$0xff]
        %v1469 = vunpack.c.l.b16 %v1457
        %v1470 = vpack.c.b16 %v1469, %v1469
        %1471 = vrot.lane.b32.xlu0 %v1470, 73
        %v1472 = vpop.permute.xlu0 %1471
        %1473 = vrot.lane.b32.xlu0 %v1470, 9
        %v1474 = vpop.permute.xlu0 %1473
        %v1477 = vsel %vm488, %v1472, %v1474
        %v1479 = vunpack.c.l.bf16 %v1477
        %v1480 = vmul.f32 %v1479, %v498
        %v1481 = vpack.c.bf16 %v1480, %v1480
        %1482 = vrot.lane.b32.xlu0 %v1470, 72
        %v1483 = vpop.permute.xlu0 %1482
        %1484 = vrot.lane.b32.xlu0 %v1470, 8
        %v1485 = vpop.permute.xlu0 %1484
        %v1488 = vsel %vm511, %v1483, %v1485
        %v1490 = vunpack.c.l.bf16 %v1488
        %v1491 = vmul.f32 %v1490, %v521
        %v1492 = vpack.c.bf16 %v1491, %v1491
        %v1494 = vsel %vm511, %v1459, 0
        %v1497 = vsel %vm872, %v1492, 0
        %1499 = vmatpush.bf16.msra.mxu0 0
        %1500 = vmatpush.bf16.msra.mxu0 0
        %1501 = vmatpush.bf16.msra.mxu0 0
        %1502 = vmatpush.bf16.msra.mxu0 0
        %1503 = vmatpush.bf16.msra.mxu0 0
        %1504 = vmatpush.bf16.msra.mxu0 0
        %1505 = vmatpush.bf16.msra.mxu0 0
        %1506 = vmatpush.bf16.msra.mxu0 %v1497
        %1507 = vmatmul.bf16.gmra.mxu0 %v1494
        %v1508 = vpop.f32.mrf.mxu0
        %v1509 = vadd.f32 0.0, %v1508
        %v1510 = vpop.f32.mrf.mxu0
        %1511 = vdwg.mxu0
        %v1513 = vsel %vm511, %v1458, 0
        %v1516 = vsel %vm872, %v1481, 0
        %1518 = vmatpush.bf16.msra.mxu0 0
        %1519 = vmatpush.bf16.msra.mxu0 0
        %1520 = vmatpush.bf16.msra.mxu0 0
        %1521 = vmatpush.bf16.msra.mxu0 0
        %1522 = vmatpush.bf16.msra.mxu0 0
        %1523 = vmatpush.bf16.msra.mxu0 0
        %1524 = vmatpush.bf16.msra.mxu0 0
        %1525 = vmatpush.bf16.msra.mxu0 %v1516
        %1526 = vmatmul.bf16.gmra.mxu0 %v1513
        %v1527 = vpop.f32.mrf.mxu0
        %v1528 = vadd.f32 %v1509, %v1527
        %v1529 = vpop.f32.mrf.mxu0
        %1530 = vdwg.mxu0
        %1531 = vrot.lane.b32.xlu0 %v1470, 71
        %v1532 = vpop.permute.xlu0 %1531
        %1533 = vrot.lane.b32.xlu0 %v1470, 7
        %v1534 = vpop.permute.xlu0 %1533
        %v1537 = vsel %vm574, %v1532, %v1534
        %v1539 = vunpack.c.l.bf16 %v1537
        %v1540 = vmul.f32 %v1539, %v581
        %v1541 = vpack.c.bf16 %v1540, %v1540
        %v1543 = vsel %vm511, %v1460, 0
        %v1546 = vsel %vm872, %v1541, 0
        %1548 = vmatpush.bf16.msra.mxu0 0
        %1549 = vmatpush.bf16.msra.mxu0 0
        %1550 = vmatpush.bf16.msra.mxu0 0
        %1551 = vmatpush.bf16.msra.mxu0 0
        %1552 = vmatpush.bf16.msra.mxu0 0
        %1553 = vmatpush.bf16.msra.mxu0 0
        %1554 = vmatpush.bf16.msra.mxu0 0
        %1555 = vmatpush.bf16.msra.mxu0 %v1546
        %1556 = vmatmul.bf16.gmra.mxu0 %v1543
        %v1557 = vpop.f32.mrf.mxu0
        %v1558 = vadd.f32 0.0, %v1557
        %v1559 = vpop.f32.mrf.mxu0
        %1560 = vdwg.mxu0
        %v1561 = vadd.f32 %v1528, %v1558
        %1562 = vrot.lane.b32.xlu0 %v1470, 65
        %v1563 = vpop.permute.xlu0 %1562
        %1564 = vrot.lane.b32.xlu0 %v1470, 1
        %v1565 = vpop.permute.xlu0 %1564
        %v1568 = vsel %vm614, %v1563, %v1565
        %v1570 = vunpack.c.l.bf16 %v1568
        %v1571 = vmul.f32 %v1570, %v621
        %v1572 = vpack.c.bf16 %v1571, %v1571
        %v1574 = vsel %vm511, %v1461, 0
        %v1577 = vsel %vm872, %v1572, 0
        %1579 = vmatpush.bf16.msra.mxu0 0
        %1580 = vmatpush.bf16.msra.mxu0 0
        %1581 = vmatpush.bf16.msra.mxu0 0
        %1582 = vmatpush.bf16.msra.mxu0 0
        %1583 = vmatpush.bf16.msra.mxu0 0
        %1584 = vmatpush.bf16.msra.mxu0 0
        %1585 = vmatpush.bf16.msra.mxu0 0
        %1586 = vmatpush.bf16.msra.mxu0 %v1577
        %1587 = vmatmul.bf16.gmra.mxu0 %v1574
        %v1588 = vpop.f32.mrf.mxu0
        %v1589 = vadd.f32 0.0, %v1588
        %v1590 = vpop.f32.mrf.mxu0
        %1591 = vdwg.mxu0
        %v1592 = vadd.f32 %v1561, %v1589
        %v1594 = vsel %vm511, %v1462, 0
        %v1597 = vsel %vm872, %v1457, 0
        %1599 = vmatpush.bf16.msra.mxu0 0
        %1600 = vmatpush.bf16.msra.mxu0 0
        %1601 = vmatpush.bf16.msra.mxu0 0
        %1602 = vmatpush.bf16.msra.mxu0 0
        %1603 = vmatpush.bf16.msra.mxu0 0
        %1604 = vmatpush.bf16.msra.mxu0 0
        %1605 = vmatpush.bf16.msra.mxu0 0
        %1606 = vmatpush.bf16.msra.mxu0 %v1597
        %1607 = vmatmul.bf16.gmra.mxu0 %v1594
        %v1608 = vpop.f32.mrf.mxu0
        %v1609 = vadd.f32 0.0, %v1608
        %v1610 = vpop.f32.mrf.mxu0
        %1611 = vdwg.mxu0
        %v1612 = vadd.f32 %v1592, %v1609
        %1613 = vrot.lane.b32.xlu0 %v1470, 127
        %v1614 = vpop.permute.xlu0 %1613
        %1615 = vrot.lane.b32.xlu0 %v1470, 63
        %v1616 = vpop.permute.xlu0 %1615
        %v1619 = vsel %vm673, %v1614, %v1616
        %v1621 = vunpack.c.l.bf16 %v1619
        %v1622 = vmul.f32 %v1621, %v680
        %v1623 = vpack.c.bf16 %v1622, %v1622
        %v1625 = vsel %vm511, %v1463, 0
        %v1628 = vsel %vm872, %v1623, 0
        %1630 = vmatpush.bf16.msra.mxu0 0
        %1631 = vmatpush.bf16.msra.mxu0 0
        %1632 = vmatpush.bf16.msra.mxu0 0
        %1633 = vmatpush.bf16.msra.mxu0 0
        %1634 = vmatpush.bf16.msra.mxu0 0
        %1635 = vmatpush.bf16.msra.mxu0 0
        %1636 = vmatpush.bf16.msra.mxu0 0
        %1637 = vmatpush.bf16.msra.mxu0 %v1628
        %1638 = vmatmul.bf16.gmra.mxu0 %v1625
        %v1639 = vpop.f32.mrf.mxu0
        %v1640 = vadd.f32 0.0, %v1639
        %v1641 = vpop.f32.mrf.mxu0
        %1642 = vdwg.mxu0
        %v1643 = vadd.f32 %v1612, %v1640
        %1644 = vrot.lane.b32.xlu0 %v1470, 121
        %v1645 = vpop.permute.xlu0 %1644
        %1646 = vrot.lane.b32.xlu0 %v1470, 57
        %v1647 = vpop.permute.xlu0 %1646
        %v1650 = vsel %vm713, %v1645, %v1647
        %v1652 = vunpack.c.l.bf16 %v1650
        %v1653 = vmul.f32 %v1652, %v720
        %v1654 = vpack.c.bf16 %v1653, %v1653
        %v1656 = vsel %vm511, %v1464, 0
        %v1659 = vsel %vm872, %v1654, 0
        %1661 = vmatpush.bf16.msra.mxu0 0
        %1662 = vmatpush.bf16.msra.mxu0 0
        %1663 = vmatpush.bf16.msra.mxu0 0
        %1664 = vmatpush.bf16.msra.mxu0 0
        %1665 = vmatpush.bf16.msra.mxu0 0
        %1666 = vmatpush.bf16.msra.mxu0 0
        %1667 = vmatpush.bf16.msra.mxu0 0
        %1668 = vmatpush.bf16.msra.mxu0 %v1659
        %1669 = vmatmul.bf16.gmra.mxu0 %v1656
        %v1670 = vpop.f32.mrf.mxu0
        %v1671 = vadd.f32 0.0, %v1670
        %v1672 = vpop.f32.mrf.mxu0
        %1673 = vdwg.mxu0
        %v1674 = vadd.f32 %v1643, %v1671
        %1675 = vrot.lane.b32.xlu0 %v1470, 120
        %v1676 = vpop.permute.xlu0 %1675
        %1677 = vrot.lane.b32.xlu0 %v1470, 56
        %v1678 = vpop.permute.xlu0 %1677
        %v1681 = vsel %vm753, %v1676, %v1678
        %v1683 = vunpack.c.l.bf16 %v1681
        %v1684 = vmul.f32 %v1683, %v760
        %v1685 = vpack.c.bf16 %v1684, %v1684
        %v1687 = vsel %vm511, %v1465, 0
        %v1690 = vsel %vm872, %v1685, 0
        %1692 = vmatpush.bf16.msra.mxu0 0
        %1693 = vmatpush.bf16.msra.mxu0 0
        %1694 = vmatpush.bf16.msra.mxu0 0
        %1695 = vmatpush.bf16.msra.mxu0 0
        %1696 = vmatpush.bf16.msra.mxu0 0
        %1697 = vmatpush.bf16.msra.mxu0 0
        %1698 = vmatpush.bf16.msra.mxu0 0
        %1699 = vmatpush.bf16.msra.mxu0 %v1690
        %1700 = vmatmul.bf16.gmra.mxu0 %v1687
        %v1701 = vpop.f32.mrf.mxu0
        %v1702 = vadd.f32 0.0, %v1701
        %v1703 = vpop.f32.mrf.mxu0
        %1704 = vdwg.mxu0
        %v1705 = vadd.f32 %v1674, %v1702
        %1706 = vrot.lane.b32.xlu0 %v1470, 119
        %v1707 = vpop.permute.xlu0 %1706
        %1708 = vrot.lane.b32.xlu0 %v1470, 55
        %v1709 = vpop.permute.xlu0 %1708
        %v1712 = vsel %vm793, %v1707, %v1709
        %v1714 = vunpack.c.l.bf16 %v1712
        %v1715 = vmul.f32 %v1714, %v803
        %v1716 = vpack.c.bf16 %v1715, %v1715
        %v1718 = vsel %vm511, %v1466, 0
        %v1721 = vsel %vm872, %v1716, 0
        %1723 = vmatpush.bf16.msra.mxu0 0
        %1724 = vmatpush.bf16.msra.mxu0 0
        %1725 = vmatpush.bf16.msra.mxu0 0
        %1726 = vmatpush.bf16.msra.mxu0 0
        %1727 = vmatpush.bf16.msra.mxu0 0
        %1728 = vmatpush.bf16.msra.mxu0 0
        %1729 = vmatpush.bf16.msra.mxu0 0
        %1730 = vmatpush.bf16.msra.mxu0 %v1721
        %1731 = vmatmul.bf16.gmra.mxu0 %v1718
        %v1732 = vpop.f32.mrf.mxu0
        %v1733 = vadd.f32 0.0, %v1732
        %v1734 = vpop.f32.mrf.mxu0
        %1735 = vdwg.mxu0
        %v1736 = vadd.f32 %v1705, %v1733
        %1738 = vset.pattern.permute.xlu0 0
        %1739 = vperm.xlu0 %1738, %v1467
        %v1740 = vpop.permute.xlu0 %1739
        %v1742 = vadd.f32 %v1736, %v1740
        %v1743 = vmax.f32 %v1742, 0.0
        %v1744 = vpack.c.bf16 %v1743, %v1743
        %v1745 = vld [vmem:[%s12] sm:$0xf]
        %v1746 = vld [vmem:[%s13] sm:$0xff]
        %v1748 = vunpack.c.l.b16 %v1745
        %v1749 = vpack.c.b16 %v1748, %v1748
        %1750 = vrot.lane.b32.xlu0 %v1749, 120
        %v1751 = vpop.permute.xlu0 %1750
        %v1753 = vsel %vm524, %v1751, 0
        %1755 = vmatpush.bf16.msra.mxu0 0
        %1756 = vmatpush.bf16.msra.mxu0 0
        %1757 = vmatpush.bf16.msra.mxu0 0
        %1758 = vmatpush.bf16.msra.mxu0 0
        %1759 = vmatpush.bf16.msra.mxu0 0
        %1760 = vmatpush.bf16.msra.mxu0 0
        %1761 = vmatpush.bf16.msra.mxu0 0
        %1762 = vmatpush.bf16.msra.mxu0 %v647
        %1763 = vmatmul.bf16.gmra.mxu0 %v1753
        %v1764 = vpop.f32.mrf.mxu0
        %v1765 = vadd.f32 0.0, %v1764
        %v1766 = vpop.f32.mrf.mxu0
        %1767 = vdwg.mxu0
        %v1769 = vsel %vm511, %v1745, 0
        %1771 = vmatpush.bf16.msra.mxu0 0
        %1772 = vmatpush.bf16.msra.mxu0 0
        %1773 = vmatpush.bf16.msra.mxu0 0
        %1774 = vmatpush.bf16.msra.mxu0 0
        %1775 = vmatpush.bf16.msra.mxu0 0
        %1776 = vmatpush.bf16.msra.mxu0 0
        %1777 = vmatpush.bf16.msra.mxu0 0
        %1778 = vmatpush.bf16.msra.mxu0 %v1310
        %1779 = vmatmul.bf16.gmra.mxu0 %v1769
        %v1780 = vpop.f32.mrf.mxu0
        %v1781 = vadd.f32 %v1765, %v1780
        %v1782 = vpop.f32.mrf.mxu0
        %1783 = vdwg.mxu0
        %1784 = vrot.lane.b32.xlu0 %v1749, 116
        %v1785 = vpop.permute.xlu0 %1784
        %v1787 = vsel %vm511, %v1785, 0
        %1789 = vmatpush.bf16.msra.mxu0 0
        %1790 = vmatpush.bf16.msra.mxu0 0
        %1791 = vmatpush.bf16.msra.mxu0 0
        %1792 = vmatpush.bf16.msra.mxu0 0
        %1793 = vmatpush.bf16.msra.mxu0 0
        %1794 = vmatpush.bf16.msra.mxu0 0
        %1795 = vmatpush.bf16.msra.mxu0 0
        %1796 = vmatpush.bf16.msra.mxu0 %v1597
        %1797 = vmatmul.bf16.gmra.mxu0 %v1787
        %v1798 = vpop.f32.mrf.mxu0
        %v1799 = vadd.f32 0.0, %v1798
        %v1800 = vpop.f32.mrf.mxu0
        %1801 = vdwg.mxu0
        %v1802 = vadd.f32 %v1781, %v1799
        %1803 = vrot.lane.b32.xlu0 %v1749, 108
        %v1804 = vpop.permute.xlu0 %1803
        %v1806 = vsel %vm511, %v1804, 0
        %v1809 = vsel %vm872, %v1744, 0
        %1811 = vmatpush.bf16.msra.mxu0 0
        %1812 = vmatpush.bf16.msra.mxu0 0
        %1813 = vmatpush.bf16.msra.mxu0 0
        %1814 = vmatpush.bf16.msra.mxu0 0
        %1815 = vmatpush.bf16.msra.mxu0 0
        %1816 = vmatpush.bf16.msra.mxu0 0
        %1817 = vmatpush.bf16.msra.mxu0 0
        %1818 = vmatpush.bf16.msra.mxu0 %v1809
        %1819 = vmatmul.bf16.gmra.mxu0 %v1806
        %v1820 = vpop.f32.mrf.mxu0
        %v1821 = vadd.f32 0.0, %v1820
        %v1822 = vpop.f32.mrf.mxu0
        %1823 = vdwg.mxu0
        %v1824 = vadd.f32 %v1802, %v1821
        %1826 = vset.pattern.permute.xlu0 0
        %1827 = vperm.xlu0 %1826, %v1746
        %v1828 = vpop.permute.xlu0 %1827
        %v1830 = vadd.f32 %v1824, %v1828
        %vm1831 = vcmask 523264
        %1832 = vst.msk [vmem:[%s458] sm:$0xff] %vm1831, %v1830
        %s1833 = sand.u32 %s335, 1
        %s1834 = scalar_lea.sflag [#allocation3], %s1833
        %s1835 = sand.u32 %s335, 1
        %s1836 = smul.addr %s1835, 8
        %s1837 = scalar_lea.vmem [#allocation2], %s1836
        // Predicated region
        $region77: #{tpu_custom_call.1} parent=75 // pred_check
          %p1838 = pneg %p345
        $region78: #{tpu_custom_call.1} parent=75 // pred_check_branch
          %1840 = sbr.rel (%p1838) target = $region80
        $region79: #{tpu_custom_call.1} parent=75 // pred_region
          %1842 = vsyncadd %s1834, 0
          %s1843 = smul.addr %s28, 8
          %s1844 = scalar_lea.hbm %s14, %s1843
          %s1846 = sshll.u32 %s1837, 4
          %s1847 = int_to_ptr.vmem [resolvable:$true] %s1846
          %s1848 = sshll.u32 %s1844, 4
          %s1849 = int_to_ptr.hbm [resolvable:$true] %s1848
          %1851 = dma.vmem_to_hbm [thread:$0]  %s1847, 128, %s1849, %s1834
        $region80: #{tpu_custom_call.1} parent=75 // pred_fallthru
          _
      $region76: #{tpu_custom_call.1} parent=5 // pred_fallthru
        _
      %p1852 = scmp.le.s32.totalorder 2, %s23
      // Predicated region
      $region81: #{tpu_custom_call.1} parent=5 // pred_check
        %p1853 = pneg %p1852
      $region82: #{tpu_custom_call.1} parent=5 // pred_check_branch
        %1855 = sbr.rel (%p1853) target = $region84
      $region83: #{tpu_custom_call.1} parent=5 // pred_region
        %s1856 = ssub.s32 %s23, 2
        // Predicated region
        $region85: #{tpu_custom_call.1} parent=83 // pred_check
          %p1857 = pneg %p351
        $region86: #{tpu_custom_call.1} parent=83 // pred_check_branch
          %1859 = sbr.rel (%p1857) target = $region88
        $region87: #{tpu_custom_call.1} parent=83 // pred_region
          %s1860 = sand.u32 %s336, 1
          %s1861 = scalar_lea.sflag [#allocation3], %s1860
          %s1862 = sand.u32 %s336, 1
          %s1863 = smul.addr %s1862, 8
          %s1864 = scalar_lea.vmem [#allocation2], %s1863
          %1866 = dma.done %s1861, 128
        $region88: #{tpu_custom_call.1} parent=83 // pred_fallthru
          _
      $region84: #{tpu_custom_call.1} parent=5 // pred_fallthru
        _
    $region6: #{tpu_custom_call.1} parent=1 // loop_footer
      %s27 = sadd.s32 1, %s23
    $region7: #{tpu_custom_call.1} parent=1 // loop_footer_branch
      %22 = sbr.rel target = $region3
    $region8: #{tpu_custom_call.1} parent=1 // loop_exit
      _
    %1867 = vsyncpa [#allocation3], 1
    %s1868 = scalar_lea.sflag [#allocation3], 1
    %1869 = vsyncpa %s1868, 1

</llo_original>
